<compile_context>
chip_gen: v7x
topology: tpu7x:2x2x1
jax: 0.10.0
libtpu: 0.0.40
codegen_flags: <defaults>
</compile_context>

<pallas_src>
import jax
import jax.numpy as jnp
from jax import lax
from jax.experimental import pallas as pl
from jax.experimental.pallas import tpu as pltpu


# ---------------------------------------------------------------------------
# Fused kernel: conv(T) + GroupNorm(1,C) + ReLU + MLP + [p_delta || p_sigma]
# ---------------------------------------------------------------------------
def fused_decoder_kernel(patches_ref, wct_ref, gamma_ref, beta_ref,
                         w1_ref, b1_ref, w2_ref, b2_ref, wh_ref, bh_ref,
                         out_ref):
    N, _, HW = patches_ref.shape          # (N, 9*Cin, H*W)
    Cout = wct_ref.shape[0]
    K = out_ref.shape[1] // 2
    inv_cnt = 1.0 / float(Cout * HW)

    wct = wct_ref[...]                    # (Cout, 9*Cin)
    gamma = gamma_ref[...]                # (Cout, 1)
    beta = beta_ref[...]                  # (Cout, 1)

    # --- conv (channel-major, lane-dense) + GroupNorm(1,C) + ReLU, per sample ---
    acts = []
    for n in range(N):
        conv = jnp.dot(wct, patches_ref[n],
                       preferred_element_type=jnp.float32)       # (Cout, HW)
        # one-pass stats over all (C, H, W) of this sample
        s1 = jnp.sum(conv)
        s2 = jnp.sum(conv * conv)
        mean = s1 * inv_cnt
        var = s2 * inv_cnt - mean * mean                          # biased variance
        gn = (conv - mean) * lax.rsqrt(var + 1e-5)
        gn = gn * gamma + beta                                    # per-channel affine
        acts.append(jnp.maximum(gn, 0.0))                         # ReLU

    # --- Linear(Cout*HW, H1): NCHW Flatten(1) order == channel-major row chunks ---
    h = None
    for c in range(Cout):
        xc = jnp.concatenate([acts[n][c:c + 1, :] for n in range(N)], axis=0)  # (N, HW)
        d = jnp.dot(xc, w1_ref[c], preferred_element_type=jnp.float32)         # (N, H1)
        h = d if h is None else h + d
    h = jnp.maximum(h + b1_ref[...], 0.0)

    # --- Linear(H1, H2) + ReLU ---
    h = jnp.maximum(
        jnp.dot(h, w2_ref[...], preferred_element_type=jnp.float32) + b2_ref[...],
        0.0)

    # --- fused heads: one (H2, 2K) matmul; sigmoid on the second half only ---
    z = jnp.dot(h, wh_ref[...], preferred_element_type=jnp.float32) + bh_ref[...]  # (N, 2K)
    zs = 1.0 / (1.0 + jnp.exp(-z))                                # Sigmoid
    col = lax.broadcasted_iota(jnp.int32, z.shape, 1)
    out_ref[...] = jnp.where(col >= K, zs, z)


def _full_spec(shape):
    nd = len(shape)
    return pl.BlockSpec(shape, lambda i, _nd=nd: (0,) * _nd)


# ---------------------------------------------------------------------------
# Wrapper: minimal glue (pad, transposed im2col, parameter packing) + one call
# ---------------------------------------------------------------------------
def pose_laplacian_decoder_forward(x_nchw, params):
    N, Cin, H, W = x_nchw.shape
    Cout = params["gn_gamma"].shape[0]
    K = params["bd"].shape[-1]
    HW = H * W
    H1 = params["b1"].shape[-1]

    # Spatial pad + im2col in transposed form: patches_t[n, t*Cin+ci, h*W+w]
    x_pad = jnp.pad(x_nchw, ((0, 0), (0, 0), (1, 1), (1, 1)))
    taps = [x_pad[:, :, kh:kh + H, kw:kw + W] for kh in range(3) for kw in range(3)]
    patches_t = jnp.stack(taps, axis=1).reshape(N, 9 * Cin, HW)    # (N, 9*Cin, H*W)

    # Conv weight OIHW -> (co, kh, kw, ci) -> (Cout, 9*Cin), matching tap order.
    wct = jnp.transpose(params["conv_w"], (0, 2, 3, 1)).reshape(Cout, 9 * Cin)
    gamma = params["gn_gamma"].reshape(Cout, 1)
    beta = params["gn_beta"].reshape(Cout, 1)
    w1r = params["w1"].reshape(Cout, HW, H1)                       # channel-major chunks
    wh = jnp.concatenate([params["wd"], params["ws"]], axis=-1)    # (H2, 2K)
    bh = jnp.concatenate([params["bd"], params["bs"]], axis=-1)    # (1, 2K)

    operands = (patches_t, wct, gamma, beta, w1r, params["b1"],
                params["w2"], params["b2"], wh, bh)

    out = pl.pallas_call(
        fused_decoder_kernel,
        out_shape=jax.ShapeDtypeStruct((N, 2 * K), jnp.float32),
        grid=(1,),
        in_specs=[_full_spec(op.shape) for op in operands],
        out_specs=_full_spec((N, 2 * K)),
        compiler_params=pltpu.CompilerParams(dimension_semantics=("arbitrary",)),
    )(*operands)

    return {"p_delta": out[:, :K], "p_sigma": out[:, K:]}


# ---------------------------------------------------------------------------
# Pure-JAX reference (mirrors the PyTorch forward, eval mode)
# ---------------------------------------------------------------------------
def reference_forward(x_nchw, params):
    N = x_nchw.shape[0]
    conv = lax.conv_general_dilated(
        x_nchw, params["conv_w"], (1, 1), ((1, 1), (1, 1)),
        dimension_numbers=("NCHW", "OIHW", "NCHW"),
        precision=lax.Precision.HIGHEST)
    mean = jnp.mean(conv, axis=(1, 2, 3), keepdims=True)
    var = jnp.mean((conv - mean) ** 2, axis=(1, 2, 3), keepdims=True)
    gn = (conv - mean) / jnp.sqrt(var + 1e-5)
    gn = gn * params["gn_gamma"].reshape(1, -1, 1, 1) + params["gn_beta"].reshape(1, -1, 1, 1)
    act = jnp.maximum(gn, 0.0)
    flat = act.reshape(N, -1)                       # Flatten(1) on NCHW
    hp = lax.Precision.HIGHEST
    h = jnp.maximum(jnp.dot(flat, params["w1"], precision=hp) + params["b1"], 0.0)
    h = jnp.maximum(jnp.dot(h, params["w2"], precision=hp) + params["b2"], 0.0)
    pd = jnp.dot(h, params["wd"], precision=hp) + params["bd"]
    ps = jax.nn.sigmoid(jnp.dot(h, params["ws"], precision=hp) + params["bs"])
    return {"p_delta": pd, "p_sigma": ps}


if __name__ == "__main__":
    # Module config (small): in_channels=4, frame_size=(16,16),
    # after_compression_flat_size=1024 -> num_compression_channels = 1024/256 = 4,
    # hidden_size=[256,256], num_of_outputs=4, no embeddings.
    N, Cin, H, W = 2, 4, 16, 16
    Cc = 1024 // (H * W)          # num_compression_channels = 4
    D = 1024                      # after_compression_flat_size
    H1, H2, K = 256, 256, 4

    key = jax.random.PRNGKey(0)
    ks = jax.random.split(key, 12)
    params = {
        "conv_w":  0.1 * jax.random.normal(ks[0], (Cc, Cin, 3, 3), jnp.float32),
        "gn_gamma": 1.0 + 0.1 * jax.random.normal(ks[1], (Cc,), jnp.float32),
        "gn_beta": 0.1 * jax.random.normal(ks[2], (Cc,), jnp.float32),
        "w1": (1.0 / 32.0) * jax.random.normal(ks[3], (D, H1), jnp.float32),
        "b1": 0.1 * jax.random.normal(ks[4], (1, H1), jnp.float32),
        "w2": (1.0 / 16.0) * jax.random.normal(ks[5], (H1, H2), jnp.float32),
        "b2": 0.1 * jax.random.normal(ks[6], (1, H2), jnp.float32),
        "wd": (1.0 / 16.0) * jax.random.normal(ks[7], (H2, K), jnp.float32),
        "bd": 0.1 * jax.random.normal(ks[8], (1, K), jnp.float32),
        "ws": (1.0 / 16.0) * jax.random.normal(ks[9], (H2, K), jnp.float32),
        "bs": 0.1 * jax.random.normal(ks[10], (1, K), jnp.float32),
    }
    x = jax.random.normal(ks[11], (N, Cin, H, W), jnp.float32)

    out = pose_laplacian_decoder_forward(x, params)
    out = jax.block_until_ready(out)

    ref = reference_forward(x, params)
    assert out["p_delta"].shape == (N, K) and out["p_sigma"].shape == (N, K)
    assert jnp.allclose(out["p_delta"], ref["p_delta"], atol=5e-3, rtol=5e-3)
    assert jnp.allclose(out["p_sigma"], ref["p_sigma"], atol=5e-3, rtol=5e-3)

    print("KERNEL_OK")
</pallas_src>

<mosaic_0001>
module attributes {stable_mosaic.version = 11 : i64} {
  func.func @fused_decoder_kernel(%arg0: i32, %arg1: memref<2x36x256xf32, #tpu.memory_space<vmem>>, %arg2: memref<4x36xf32, #tpu.memory_space<vmem>>, %arg3: memref<4x1xf32, #tpu.memory_space<vmem>>, %arg4: memref<4x1xf32, #tpu.memory_space<vmem>>, %arg5: memref<4x256x256xf32, #tpu.memory_space<vmem>>, %arg6: memref<1x256xf32, #tpu.memory_space<vmem>>, %arg7: memref<256x256xf32, #tpu.memory_space<vmem>>, %arg8: memref<1x256xf32, #tpu.memory_space<vmem>>, %arg9: memref<256x8xf32, #tpu.memory_space<vmem>>, %arg10: memref<1x8xf32, #tpu.memory_space<vmem>>, %arg11: memref<2x8xf32, #tpu.memory_space<vmem>>) attributes {dimension_semantics = [#tpu.dimension_semantics<arbitrary>], iteration_bounds = array<i64: 1>, scalar_prefetch = 0 : i64, scratch_operands = 0 : i64, tpu.core_type = #tpu.core_type<tc>, window_params = [{pipeline_mode = #tpu.pipeline_mode<synchronous>, transform_indices = @transform_0, window_bounds = array<i64: 2, 36, 256>}, {pipeline_mode = #tpu.pipeline_mode<synchronous>, transform_indices = @transform_1, window_bounds = array<i64: 4, 36>}, {pipeline_mode = #tpu.pipeline_mode<synchronous>, transform_indices = @transform_2, window_bounds = array<i64: 4, 1>}, {pipeline_mode = #tpu.pipeline_mode<synchronous>, transform_indices = @transform_3, window_bounds = array<i64: 4, 1>}, {pipeline_mode = #tpu.pipeline_mode<synchronous>, transform_indices = @transform_4, window_bounds = array<i64: 4, 256, 256>}, {pipeline_mode = #tpu.pipeline_mode<synchronous>, transform_indices = @transform_5, window_bounds = array<i64: 1, 256>}, {pipeline_mode = #tpu.pipeline_mode<synchronous>, transform_indices = @transform_6, window_bounds = array<i64: 256, 256>}, {pipeline_mode = #tpu.pipeline_mode<synchronous>, transform_indices = @transform_7, window_bounds = array<i64: 1, 256>}, {pipeline_mode = #tpu.pipeline_mode<synchronous>, transform_indices = @transform_8, window_bounds = array<i64: 256, 8>}, {pipeline_mode = #tpu.pipeline_mode<synchronous>, transform_indices = @transform_9, window_bounds = array<i64: 1, 8>}, {pipeline_mode = #tpu.pipeline_mode<synchronous>, transform_indices = @transform_10, window_bounds = array<i64: 2, 8>}]} {
    %c0 = arith.constant 0 : index
    %c0_0 = arith.constant 0 : index
    %0 = vector.load %arg2[%c0, %c0_0] : memref<4x36xf32, #tpu.memory_space<vmem>>, vector<4x36xf32>
    %c0_1 = arith.constant 0 : index
    %c0_2 = arith.constant 0 : index
    %1 = vector.load %arg3[%c0_1, %c0_2] : memref<4x1xf32, #tpu.memory_space<vmem>>, vector<4x1xf32>
    %c0_3 = arith.constant 0 : index
    %c0_4 = arith.constant 0 : index
    %2 = vector.load %arg4[%c0_3, %c0_4] : memref<4x1xf32, #tpu.memory_space<vmem>>, vector<4x1xf32>
    %c0_5 = arith.constant 0 : index
    %c0_6 = arith.constant 0 : index
    %c0_7 = arith.constant 0 : index
    %3 = vector.load %arg1[%c0_5, %c0_6, %c0_7] : memref<2x36x256xf32, #tpu.memory_space<vmem>>, vector<1x36x256xf32>
    %4 = vector.shape_cast %3 : vector<1x36x256xf32> to vector<36x256xf32>
    %cst = arith.constant dense<0.000000e+00> : vector<4x256xf32>
    %5 = tpu.matmul %0, %4, %cst {dimension_numbers = #tpu.dot_dimension_numbers<[1], [0], [0], [1], [0, 0, 1, 1], [], []>} : vector<4x36xf32>, vector<36x256xf32>, vector<4x256xf32> -> vector<4x256xf32>
    %6 = vector.shape_cast %5 : vector<4x256xf32> to vector<1x4x256xf32>
    %cst_8 = arith.constant dense<0.000000e+00> : vector<1xf32>
    %7 = vector.multi_reduction <add>, %6, %cst_8 [1, 2] : vector<1x4x256xf32> to vector<1xf32>
    %8 = vector.shape_cast %7 : vector<1xf32> to vector<1x1x1xf32>
    %9 = vector.extract %8[0, 0, 0] : f32 from vector<1x1x1xf32>
    %10 = arith.mulf %5, %5 : vector<4x256xf32>
    %11 = vector.shape_cast %10 : vector<4x256xf32> to vector<1x4x256xf32>
    %cst_9 = arith.constant dense<0.000000e+00> : vector<1xf32>
    %12 = vector.multi_reduction <add>, %11, %cst_9 [1, 2] : vector<1x4x256xf32> to vector<1xf32>
    %13 = vector.shape_cast %12 : vector<1xf32> to vector<1x1x1xf32>
    %14 = vector.extract %13[0, 0, 0] : f32 from vector<1x1x1xf32>
    %cst_10 = arith.constant 9.765625E-4 : f32
    %15 = arith.mulf %9, %cst_10 : f32
    %cst_11 = arith.constant 9.765625E-4 : f32
    %16 = arith.mulf %14, %cst_11 : f32
    %17 = arith.mulf %15, %15 : f32
    %18 = arith.subf %16, %17 : f32
    %19 = vector.broadcast %15 : f32 to vector<4x256xf32>
    %20 = arith.subf %5, %19 : vector<4x256xf32>
    %cst_12 = arith.constant 9.99999974E-6 : f32
    %21 = arith.addf %18, %cst_12 : f32
    %22 = math.rsqrt %21 : f32
    %23 = vector.broadcast %22 : f32 to vector<4x256xf32>
    %24 = arith.mulf %20, %23 : vector<4x256xf32>
    %25 = vector.broadcast %1 : vector<4x1xf32> to vector<4x256xf32>
    %26 = arith.mulf %24, %25 : vector<4x256xf32>
    %27 = vector.broadcast %2 : vector<4x1xf32> to vector<4x256xf32>
    %28 = arith.addf %26, %27 : vector<4x256xf32>
    %cst_13 = arith.constant 0.000000e+00 : f32
    %29 = vector.broadcast %cst_13 : f32 to vector<4x256xf32>
    %30 = arith.maximumf %28, %29 : vector<4x256xf32>
    %c1 = arith.constant 1 : index
    %c0_14 = arith.constant 0 : index
    %c0_15 = arith.constant 0 : index
    %31 = vector.load %arg1[%c1, %c0_14, %c0_15] : memref<2x36x256xf32, #tpu.memory_space<vmem>>, vector<1x36x256xf32>
    %32 = vector.shape_cast %31 : vector<1x36x256xf32> to vector<36x256xf32>
    %cst_16 = arith.constant dense<0.000000e+00> : vector<4x256xf32>
    %33 = tpu.matmul %0, %32, %cst_16 {dimension_numbers = #tpu.dot_dimension_numbers<[1], [0], [0], [1], [0, 0, 1, 1], [], []>} : vector<4x36xf32>, vector<36x256xf32>, vector<4x256xf32> -> vector<4x256xf32>
    %34 = vector.shape_cast %33 : vector<4x256xf32> to vector<1x4x256xf32>
    %cst_17 = arith.constant dense<0.000000e+00> : vector<1xf32>
    %35 = vector.multi_reduction <add>, %34, %cst_17 [1, 2] : vector<1x4x256xf32> to vector<1xf32>
    %36 = vector.shape_cast %35 : vector<1xf32> to vector<1x1x1xf32>
    %37 = vector.extract %36[0, 0, 0] : f32 from vector<1x1x1xf32>
    %38 = arith.mulf %33, %33 : vector<4x256xf32>
    %39 = vector.shape_cast %38 : vector<4x256xf32> to vector<1x4x256xf32>
    %cst_18 = arith.constant dense<0.000000e+00> : vector<1xf32>
    %40 = vector.multi_reduction <add>, %39, %cst_18 [1, 2] : vector<1x4x256xf32> to vector<1xf32>
    %41 = vector.shape_cast %40 : vector<1xf32> to vector<1x1x1xf32>
    %42 = vector.extract %41[0, 0, 0] : f32 from vector<1x1x1xf32>
    %cst_19 = arith.constant 9.765625E-4 : f32
    %43 = arith.mulf %37, %cst_19 : f32
    %cst_20 = arith.constant 9.765625E-4 : f32
    %44 = arith.mulf %42, %cst_20 : f32
    %45 = arith.mulf %43, %43 : f32
    %46 = arith.subf %44, %45 : f32
    %47 = vector.broadcast %43 : f32 to vector<4x256xf32>
    %48 = arith.subf %33, %47 : vector<4x256xf32>
    %cst_21 = arith.constant 9.99999974E-6 : f32
    %49 = arith.addf %46, %cst_21 : f32
    %50 = math.rsqrt %49 : f32
    %51 = vector.broadcast %50 : f32 to vector<4x256xf32>
    %52 = arith.mulf %48, %51 : vector<4x256xf32>
    %53 = vector.broadcast %1 : vector<4x1xf32> to vector<4x256xf32>
    %54 = arith.mulf %52, %53 : vector<4x256xf32>
    %55 = vector.broadcast %2 : vector<4x1xf32> to vector<4x256xf32>
    %56 = arith.addf %54, %55 : vector<4x256xf32>
    %cst_22 = arith.constant 0.000000e+00 : f32
    %57 = vector.broadcast %cst_22 : f32 to vector<4x256xf32>
    %58 = arith.maximumf %56, %57 : vector<4x256xf32>
    %59 = vector.extract_strided_slice %30 {offsets = [0, 0], sizes = [1, 256], strides = [1, 1]} : vector<4x256xf32> to vector<1x256xf32>
    %60 = vector.extract_strided_slice %58 {offsets = [0, 0], sizes = [1, 256], strides = [1, 1]} : vector<4x256xf32> to vector<1x256xf32>
    %61 = tpu.concatenate %59, %60 in 0 : vector<1x256xf32>, vector<1x256xf32> -> vector<2x256xf32>
    %c0_23 = arith.constant 0 : index
    %c0_24 = arith.constant 0 : index
    %c0_25 = arith.constant 0 : index
    %62 = vector.load %arg5[%c0_23, %c0_24, %c0_25] : memref<4x256x256xf32, #tpu.memory_space<vmem>>, vector<1x256x256xf32>
    %63 = vector.shape_cast %62 : vector<1x256x256xf32> to vector<256x256xf32>
    %cst_26 = arith.constant dense<0.000000e+00> : vector<2x256xf32>
    %64 = tpu.matmul %61, %63, %cst_26 {dimension_numbers = #tpu.dot_dimension_numbers<[1], [0], [0], [1], [0, 0, 1, 1], [], []>} : vector<2x256xf32>, vector<256x256xf32>, vector<2x256xf32> -> vector<2x256xf32>
    %65 = vector.extract_strided_slice %30 {offsets = [1, 0], sizes = [1, 256], strides = [1, 1]} : vector<4x256xf32> to vector<1x256xf32>
    %66 = vector.extract_strided_slice %58 {offsets = [1, 0], sizes = [1, 256], strides = [1, 1]} : vector<4x256xf32> to vector<1x256xf32>
    %67 = tpu.concatenate %65, %66 in 0 : vector<1x256xf32>, vector<1x256xf32> -> vector<2x256xf32>
    %c1_27 = arith.constant 1 : index
    %c0_28 = arith.constant 0 : index
    %c0_29 = arith.constant 0 : index
    %68 = vector.load %arg5[%c1_27, %c0_28, %c0_29] : memref<4x256x256xf32, #tpu.memory_space<vmem>>, vector<1x256x256xf32>
    %69 = vector.shape_cast %68 : vector<1x256x256xf32> to vector<256x256xf32>
    %cst_30 = arith.constant dense<0.000000e+00> : vector<2x256xf32>
    %70 = tpu.matmul %67, %69, %cst_30 {dimension_numbers = #tpu.dot_dimension_numbers<[1], [0], [0], [1], [0, 0, 1, 1], [], []>} : vector<2x256xf32>, vector<256x256xf32>, vector<2x256xf32> -> vector<2x256xf32>
    %71 = arith.addf %64, %70 : vector<2x256xf32>
    %72 = vector.extract_strided_slice %30 {offsets = [2, 0], sizes = [1, 256], strides = [1, 1]} : vector<4x256xf32> to vector<1x256xf32>
    %73 = vector.extract_strided_slice %58 {offsets = [2, 0], sizes = [1, 256], strides = [1, 1]} : vector<4x256xf32> to vector<1x256xf32>
    %74 = tpu.concatenate %72, %73 in 0 : vector<1x256xf32>, vector<1x256xf32> -> vector<2x256xf32>
    %c2 = arith.constant 2 : index
    %c0_31 = arith.constant 0 : index
    %c0_32 = arith.constant 0 : index
    %75 = vector.load %arg5[%c2, %c0_31, %c0_32] : memref<4x256x256xf32, #tpu.memory_space<vmem>>, vector<1x256x256xf32>
    %76 = vector.shape_cast %75 : vector<1x256x256xf32> to vector<256x256xf32>
    %cst_33 = arith.constant dense<0.000000e+00> : vector<2x256xf32>
    %77 = tpu.matmul %74, %76, %cst_33 {dimension_numbers = #tpu.dot_dimension_numbers<[1], [0], [0], [1], [0, 0, 1, 1], [], []>} : vector<2x256xf32>, vector<256x256xf32>, vector<2x256xf32> -> vector<2x256xf32>
    %78 = arith.addf %71, %77 : vector<2x256xf32>
    %79 = vector.extract_strided_slice %30 {offsets = [3, 0], sizes = [1, 256], strides = [1, 1]} : vector<4x256xf32> to vector<1x256xf32>
    %80 = vector.extract_strided_slice %58 {offsets = [3, 0], sizes = [1, 256], strides = [1, 1]} : vector<4x256xf32> to vector<1x256xf32>
    %81 = tpu.concatenate %79, %80 in 0 : vector<1x256xf32>, vector<1x256xf32> -> vector<2x256xf32>
    %c3 = arith.constant 3 : index
    %c0_34 = arith.constant 0 : index
    %c0_35 = arith.constant 0 : index
    %82 = vector.load %arg5[%c3, %c0_34, %c0_35] : memref<4x256x256xf32, #tpu.memory_space<vmem>>, vector<1x256x256xf32>
    %83 = vector.shape_cast %82 : vector<1x256x256xf32> to vector<256x256xf32>
    %cst_36 = arith.constant dense<0.000000e+00> : vector<2x256xf32>
    %84 = tpu.matmul %81, %83, %cst_36 {dimension_numbers = #tpu.dot_dimension_numbers<[1], [0], [0], [1], [0, 0, 1, 1], [], []>} : vector<2x256xf32>, vector<256x256xf32>, vector<2x256xf32> -> vector<2x256xf32>
    %85 = arith.addf %78, %84 : vector<2x256xf32>
    %c0_37 = arith.constant 0 : index
    %c0_38 = arith.constant 0 : index
    %86 = vector.load %arg6[%c0_37, %c0_38] : memref<1x256xf32, #tpu.memory_space<vmem>>, vector<1x256xf32>
    %87 = vector.broadcast %86 : vector<1x256xf32> to vector<2x256xf32>
    %88 = arith.addf %85, %87 : vector<2x256xf32>
    %cst_39 = arith.constant 0.000000e+00 : f32
    %89 = vector.broadcast %cst_39 : f32 to vector<2x256xf32>
    %90 = arith.maximumf %88, %89 : vector<2x256xf32>
    %c0_40 = arith.constant 0 : index
    %c0_41 = arith.constant 0 : index
    %91 = vector.load %arg7[%c0_40, %c0_41] : memref<256x256xf32, #tpu.memory_space<vmem>>, vector<256x256xf32>
    %cst_42 = arith.constant dense<0.000000e+00> : vector<2x256xf32>
    %92 = tpu.matmul %90, %91, %cst_42 {dimension_numbers = #tpu.dot_dimension_numbers<[1], [0], [0], [1], [0, 0, 1, 1], [], []>} : vector<2x256xf32>, vector<256x256xf32>, vector<2x256xf32> -> vector<2x256xf32>
    %c0_43 = arith.constant 0 : index
    %c0_44 = arith.constant 0 : index
    %93 = vector.load %arg8[%c0_43, %c0_44] : memref<1x256xf32, #tpu.memory_space<vmem>>, vector<1x256xf32>
    %94 = vector.broadcast %93 : vector<1x256xf32> to vector<2x256xf32>
    %95 = arith.addf %92, %94 : vector<2x256xf32>
    %cst_45 = arith.constant 0.000000e+00 : f32
    %96 = vector.broadcast %cst_45 : f32 to vector<2x256xf32>
    %97 = arith.maximumf %95, %96 : vector<2x256xf32>
    %c0_46 = arith.constant 0 : index
    %c0_47 = arith.constant 0 : index
    %98 = vector.load %arg9[%c0_46, %c0_47] : memref<256x8xf32, #tpu.memory_space<vmem>>, vector<256x8xf32>
    %cst_48 = arith.constant dense<0.000000e+00> : vector<2x8xf32>
    %99 = tpu.matmul %97, %98, %cst_48 {dimension_numbers = #tpu.dot_dimension_numbers<[1], [0], [0], [1], [0, 0, 1, 1], [], []>} : vector<2x256xf32>, vector<256x8xf32>, vector<2x8xf32> -> vector<2x8xf32>
    %c0_49 = arith.constant 0 : index
    %c0_50 = arith.constant 0 : index
    %100 = vector.load %arg10[%c0_49, %c0_50] : memref<1x8xf32, #tpu.memory_space<vmem>>, vector<1x8xf32>
    %101 = vector.broadcast %100 : vector<1x8xf32> to vector<2x8xf32>
    %102 = arith.addf %99, %101 : vector<2x8xf32>
    %cst_51 = arith.constant 0.000000e+00 : f32
    %103 = vector.broadcast %cst_51 : f32 to vector<2x8xf32>
    %104 = arith.subf %103, %102 : vector<2x8xf32>
    %105 = math.exp %104 : vector<2x8xf32>
    %cst_52 = arith.constant 1.000000e+00 : f32
    %106 = vector.broadcast %cst_52 : f32 to vector<2x8xf32>
    %107 = arith.addf %106, %105 : vector<2x8xf32>
    %cst_53 = arith.constant 1.000000e+00 : f32
    %108 = vector.broadcast %cst_53 : f32 to vector<2x8xf32>
    %109 = arith.divf %108, %107 : vector<2x8xf32>
    %110 = tpu.iota {dimensions = array<i32: 1>} : vector<2x8xi32>
    %c4_i32 = arith.constant 4 : i32
    %111 = vector.broadcast %c4_i32 : i32 to vector<2x8xi32>
    %112 = arith.cmpi sge, %110, %111 : vector<2x8xi32>
    %113 = arith.select %112, %109, %102 : vector<2x8xi1>, vector<2x8xf32>
    %c0_54 = arith.constant 0 : index
    %c0_55 = arith.constant 0 : index
    %114 = vector.load %arg11[%c0_54, %c0_55] : memref<2x8xf32, #tpu.memory_space<vmem>>, vector<2x8xf32>
    tpu.vector_store %arg11[%c0_54, %c0_55], %113 {strides = array<i32>} : memref<2x8xf32, #tpu.memory_space<vmem>>, vector<2x8xf32>,
    return
  }
  func.func @transform_0(%arg0: i32) -> (i32, i32, i32) {
    %c0_i32 = arith.constant 0 : i32
    %c0_i32_0 = arith.constant 0 : i32
    %c0_i32_1 = arith.constant 0 : i32
    %c0_i32_2 = arith.constant 0 : i32
    return %c0_i32, %c0_i32_0, %c0_i32_1 : i32, i32, i32
  }
  func.func @transform_1(%arg0: i32) -> (i32, i32) {
    %c0_i32 = arith.constant 0 : i32
    %c0_i32_0 = arith.constant 0 : i32
    %c0_i32_1 = arith.constant 0 : i32
    return %c0_i32, %c0_i32_0 : i32, i32
  }
  func.func @transform_2(%arg0: i32) -> (i32, i32) {
    %c0_i32 = arith.constant 0 : i32
    %c0_i32_0 = arith.constant 0 : i32
    %c0_i32_1 = arith.constant 0 : i32
    return %c0_i32, %c0_i32_0 : i32, i32
  }
  func.func @transform_3(%arg0: i32) -> (i32, i32) {
    %c0_i32 = arith.constant 0 : i32
    %c0_i32_0 = arith.constant 0 : i32
    %c0_i32_1 = arith.constant 0 : i32
    return %c0_i32, %c0_i32_0 : i32, i32
  }
  func.func @transform_4(%arg0: i32) -> (i32, i32, i32) {
    %c0_i32 = arith.constant 0 : i32
    %c0_i32_0 = arith.constant 0 : i32
    %c0_i32_1 = arith.constant 0 : i32
    %c0_i32_2 = arith.constant 0 : i32
    return %c0_i32, %c0_i32_0, %c0_i32_1 : i32, i32, i32
  }
  func.func @transform_5(%arg0: i32) -> (i32, i32) {
    %c0_i32 = arith.constant 0 : i32
    %c0_i32_0 = arith.constant 0 : i32
    %c0_i32_1 = arith.constant 0 : i32
    return %c0_i32, %c0_i32_0 : i32, i32
  }
  func.func @transform_6(%arg0: i32) -> (i32, i32) {
    %c0_i32 = arith.constant 0 : i32
    %c0_i32_0 = arith.constant 0 : i32
    %c0_i32_1 = arith.constant 0 : i32
    return %c0_i32, %c0_i32_0 : i32, i32
  }
  func.func @transform_7(%arg0: i32) -> (i32, i32) {
    %c0_i32 = arith.constant 0 : i32
    %c0_i32_0 = arith.constant 0 : i32
    %c0_i32_1 = arith.constant 0 : i32
    return %c0_i32, %c0_i32_0 : i32, i32
  }
  func.func @transform_8(%arg0: i32) -> (i32, i32) {
    %c0_i32 = arith.constant 0 : i32
    %c0_i32_0 = arith.constant 0 : i32
    %c0_i32_1 = arith.constant 0 : i32
    return %c0_i32, %c0_i32_0 : i32, i32
  }
  func.func @transform_9(%arg0: i32) -> (i32, i32) {
    %c0_i32 = arith.constant 0 : i32
    %c0_i32_0 = arith.constant 0 : i32
    %c0_i32_1 = arith.constant 0 : i32
    return %c0_i32, %c0_i32_0 : i32, i32
  }
  func.func @transform_10(%arg0: i32) -> (i32, i32) {
    %c0_i32 = arith.constant 0 : i32
    %c0_i32_0 = arith.constant 0 : i32
    %c0_i32_1 = arith.constant 0 : i32
    return %c0_i32, %c0_i32_0 : i32, i32
  }
}

</mosaic_0001>

<llo_original>
// kernel: tpu_custom_call.1
$region0: #{tpu_custom_call.1}
  #allocation0 [shape = 'u32[]', space=smem, size = 0x4, offset = 0x4, fixed_abs, tag = 'smem constant byte address 0x4 - core index']
  #allocation1 [shape = 'u32[144,128]{1,0:T(1,128)}', space=vmem, size = 0x12000, scoped, tag = 'internal scratch']
  %s0 = inlined_call_operand.vmem [shape: f32[2,36,256], index: 0, kind: input, shape index: {}]
  %s1 = inlined_call_operand.vmem [shape: f32[4,36], index: 1, kind: input, shape index: {}]
  %s2 = inlined_call_operand.vmem [shape: f32[4,1], index: 2, kind: input, shape index: {}]
  %s3 = inlined_call_operand.vmem [shape: f32[4,1], index: 3, kind: input, shape index: {}]
  %s4 = inlined_call_operand.hbm [shape: f32[4,256,256], index: 4, kind: input, shape index: {}]
  %s5 = inlined_call_operand.vmem [shape: f32[1,256], index: 5, kind: input, shape index: {}]
  %s6 = inlined_call_operand.vmem [shape: f32[256,256], index: 6, kind: input, shape index: {}]
  %s7 = inlined_call_operand.vmem [shape: f32[1,256], index: 7, kind: input, shape index: {}]
  %s8 = inlined_call_operand.vmem [shape: f32[256,8], index: 8, kind: input, shape index: {}]
  %s9 = inlined_call_operand.vmem [shape: f32[1,8], index: 9, kind: input, shape index: {}]
  %s10 = inlined_call_operand.hbm [shape: f32[2,8], index: 10, kind: output, shape index: {}]
  %s11 = sld [smem:[#allocation0]]
  $region54: #{tpu_custom_call.1} parent=0
    _
  %s13 = ssub.s32 1, %s11
  %s14 = scalar_select 0, %s13, %s11
  $region1: #{tpu_custom_call.1} parent=0
    #allocation2 [shape = 'u8[1048576]{0}', space=vmem, size = 0x100000, scoped, tag = 'input window, operand 4, single buffered']
    #allocation3 [shape = 's32[1]{0}', space=sflag, size = 0x4, scoped, tag = 'scoped memory for tpu_custom_call.1']
    #allocation4 [shape = 's32[1]{0}', space=sflag, size = 0x4, scoped, tag = 'scoped memory for tpu_custom_call.1']
    #allocation5 [shape = 'u8[1024]{0}', space=vmem, size = 0x400, scoped, tag = 'output window, operand 0, single buffered']
    %15 = vsyncpa [#allocation3], 0
    %16 = vsyncpa [#allocation4], 0
    // Predicated region
    $region2: #{tpu_custom_call.1} parent=1 // pred_check
      _
    $region3: #{tpu_custom_call.1} parent=1 // pred_check_branch
      %18 = sbr.rel (0) target = $region5
    $region4: #{tpu_custom_call.1} parent=1 // pred_region
      _
    $region5: #{tpu_custom_call.1} parent=1 // pred_fallthru
      _
    // Predicated region
    $region6: #{tpu_custom_call.1} parent=1 // pred_check
      _
    $region7: #{tpu_custom_call.1} parent=1 // pred_check_branch
      %20 = sbr.rel (0) target = $region9
    $region8: #{tpu_custom_call.1} parent=1 // pred_region
      _
    $region9: #{tpu_custom_call.1} parent=1 // pred_fallthru
      _
    // Predicated region
    $region10: #{tpu_custom_call.1} parent=1 // pred_check
      _
    $region11: #{tpu_custom_call.1} parent=1 // pred_check_branch
      %22 = sbr.rel (0) target = $region13
    $region12: #{tpu_custom_call.1} parent=1 // pred_region
      _
    $region13: #{tpu_custom_call.1} parent=1 // pred_fallthru
      _
    // Predicated region
    $region14: #{tpu_custom_call.1} parent=1 // pred_check
      _
    $region15: #{tpu_custom_call.1} parent=1 // pred_check_branch
      %24 = sbr.rel (0) target = $region17
    $region16: #{tpu_custom_call.1} parent=1 // pred_region
      _
    $region17: #{tpu_custom_call.1} parent=1 // pred_fallthru
      _
    // Predicated region
    $region18: #{tpu_custom_call.1} parent=1 // pred_check
      _
    $region19: #{tpu_custom_call.1} parent=1 // pred_check_branch
      %26 = sbr.rel (0) target = $region21
    $region20: #{tpu_custom_call.1} parent=1 // pred_region
      %s28 = ssub.s32 32768, 32768
      %29 = vsyncadd [#allocation3], %s28
      %s30 = sshll.u32 [#allocation2], 4
      %s31 = int_to_ptr.vmem [resolvable:$true] %s30
      %36 = dma.hbm_to_vmem [thread:$0]  %s4, 32768, %s31, [#allocation3], 256, 256, 16
    $region21: #{tpu_custom_call.1} parent=1 // pred_fallthru
      _
    // Predicated region
    $region22: #{tpu_custom_call.1} parent=1 // pred_check
      _
    $region23: #{tpu_custom_call.1} parent=1 // pred_check_branch
      %38 = sbr.rel (0) target = $region25
    $region24: #{tpu_custom_call.1} parent=1 // pred_region
      _
    $region25: #{tpu_custom_call.1} parent=1 // pred_fallthru
      _
    // Predicated region
    $region26: #{tpu_custom_call.1} parent=1 // pred_check
      _
    $region27: #{tpu_custom_call.1} parent=1 // pred_check_branch
      %40 = sbr.rel (0) target = $region29
    $region28: #{tpu_custom_call.1} parent=1 // pred_region
      _
    $region29: #{tpu_custom_call.1} parent=1 // pred_fallthru
      _
    // Predicated region
    $region30: #{tpu_custom_call.1} parent=1 // pred_check
      _
    $region31: #{tpu_custom_call.1} parent=1 // pred_check_branch
      %42 = sbr.rel (0) target = $region33
    $region32: #{tpu_custom_call.1} parent=1 // pred_region
      _
    $region33: #{tpu_custom_call.1} parent=1 // pred_fallthru
      _
    // Predicated region
    $region34: #{tpu_custom_call.1} parent=1 // pred_check
      _
    $region35: #{tpu_custom_call.1} parent=1 // pred_check_branch
      %44 = sbr.rel (0) target = $region37
    $region36: #{tpu_custom_call.1} parent=1 // pred_region
      _
    $region37: #{tpu_custom_call.1} parent=1 // pred_fallthru
      _
    // Predicated region
    $region38: #{tpu_custom_call.1} parent=1 // pred_check
      _
    $region39: #{tpu_custom_call.1} parent=1 // pred_check_branch
      %46 = sbr.rel (0) target = $region41
    $region40: #{tpu_custom_call.1} parent=1 // pred_region
      _
    $region41: #{tpu_custom_call.1} parent=1 // pred_fallthru
      _
    // Predicated region
    $region42: #{tpu_custom_call.1} parent=1 // pred_check
      _
    $region43: #{tpu_custom_call.1} parent=1 // pred_check_branch
      %48 = sbr.rel (0) target = $region45
    $region44: #{tpu_custom_call.1} parent=1 // pred_region
      %49 = dma.done [#allocation3], 32768
    $region45: #{tpu_custom_call.1} parent=1 // pred_fallthru
      _
    %v50 = vld [vmem:[%s1] sm:$0xf]
    %v51 = vld [vmem:[%s2] sm:$0xf]
    %v52 = vld [vmem:[%s3] sm:$0xf]
    %v53 = vld [vmem:[%s0] sm:$0xff]
    %v54 = vld [vmem:[%s0 + $0x8] sm:$0xff]
    %v55 = vld [vmem:[%s0 + $0x10] sm:$0xff]
    %v56 = vld [vmem:[%s0 + $0x18] sm:$0xff]
    %v57 = vld [vmem:[%s0 + $0x20] sm:$0xff]
    %v58 = vld [vmem:[%s0 + $0x28] sm:$0xff]
    %v59 = vld [vmem:[%s0 + $0x30] sm:$0xff]
    %v60 = vld [vmem:[%s0 + $0x38] sm:$0xff]
    %v61 = vld [vmem:[%s0 + $0x40] sm:$0xf]
    %v62 = vld [vmem:[%s0 + $0x48] sm:$0xf]
    %vm63 = vcmask 293888
    %v65 = vsel %vm63, %v50, 0
    %vm67 = vcmask 1043456
    %v69 = vsel %vm67, %v61, 0
    %v72 = vsel %vm67, %v62, 0
    %74 = vmatprep.subr.mxu0 %v54
    %75 = vmatpush1.msra.mxu0 %v53
    %76 = vmatprep.subr.mxu0 %v56
    %77 = vmatpush1.msra.mxu0 %v55
    %78 = vmatprep.subr.mxu0 %v58
    %79 = vmatpush1.msra.mxu0 %v57
    %80 = vmatprep.subr.mxu0 %v60
    %81 = vmatpush1.msra.mxu0 %v59
    %82 = vmatprep.subr.mxu0 %v72
    %83 = vmatpush1.msra.mxu0 %v69
    %84 = vmatprep.subr.mxu0 0.0
    %85 = vmatpush1.msra.mxu0 0.0
    %86 = vmatprep.subr.mxu0 0.0
    %87 = vmatpush1.msra.mxu0 0.0
    %88 = vmatprep.subr.mxu0 0.0
    %89 = vmatpush1.msra.mxu0 0.0
    %90 = vmatprep.subr.mxu0 0.0
    %91 = vmatpush1.msra.mxu0 0.0
    %92 = vmatprep.subr.mxu0 0.0
    %93 = vmatpush1.msra.mxu0 0.0
    %94 = vmatprep.subr.mxu0 0.0
    %95 = vmatpush1.msra.mxu0 0.0
    %96 = vmatprep.subr.mxu0 0.0
    %97 = vmatpush1.msra.mxu0 0.0
    %98 = vmatprep.subr.mxu0 0.0
    %99 = vmatpush1.msra.mxu0 0.0
    %100 = vmatprep.subr.mxu0 0.0
    %101 = vmatpush1.msra.mxu0 0.0
    %102 = vmatprep.subr.mxu0 0.0
    %103 = vmatpush1.msra.mxu0 0.0
    %104 = vmatprep.subr.mxu0 0.0
    %105 = vmatpush1.msra.mxu0 0.0
    %106 = vmatprep.subr.mxu0 0.0
    %107 = vmatpush1.msra.mxu0 0.0
    %108 = vmatprep.subr.mxu0 0.0
    %109 = vmatpush1.msra.mxu0 0.0
    %110 = vmatprep.subr.mxu0 0.0
    %111 = vmatpush1.msra.mxu0 0.0
    %112 = vmatprep.subr.mxu0 0.0
    %113 = vmatpush1.msra.mxu0 0.0
    %114 = vmatprep.subr.mxu0 0.0
    %115 = vmatpush1.msra.mxu0 0.0
    %116 = vmatprep.subr.mxu0 0.0
    %117 = vmatpush1.msra.mxu0 0.0
    %118 = vmatprep.subr.mxu0 0.0
    %119 = vmatpush1.msra.mxu0 0.0
    %120 = vmatprep.subr.mxu0 0.0
    %121 = vmatpush1.msra.mxu0 0.0
    %122 = vmatprep.subr.mxu0 0.0
    %123 = vmatpush1.msra.mxu0 0.0
    %124 = vmatprep.subr.mxu0 0.0
    %125 = vmatpush1.msra.mxu0 0.0
    %126 = vmatprep.subr.mxu0 0.0
    %127 = vmatpush1.msra.mxu0 0.0
    %128 = vmatprep.subr.mxu0 0.0
    %129 = vmatpush1.msra.mxu0 0.0
    %130 = vmatprep.subr.mxu0 0.0
    %131 = vmatpush1.msra.mxu0 0.0
    %132 = vmatprep.subr.mxu0 0.0
    %133 = vmatpush1.msra.mxu0 0.0
    %134 = vmatprep.subr.mxu0 0.0
    %135 = vmatpush1.msra.mxu0 0.0
    %136 = vmatprep.subr.mxu0 0.0
    %137 = vmatpush1.msra.mxu0 0.0
    %138 = vmatprep.mubr.f32.mxu0 0.0
    %139 = vmatmul.mubr.f32.gmra.mrb[0].mxu0 %v65
    %v140 = vpop.f32.mrb[0].mxu0
    %v141 = vadd.f32 0.0, %v140
    %v142 = vpop.f32.mrb[0].mxu0
    %v143 = vadd.f32 0.0, %v142
    %144 = vdwg.mxu0
    %v145 = vsel %vm67, %v141, 0.0
    %v146 = vsel %vm67, %v143, 0.0
    %v147 = vadd.f32 %v145, %v146
    %148 = vadd.xlane.f32.xlu0 %v147
    %v149 = vpop.xlane.xlu0 %148
    %v150 = vrot.slane %v149, 4
    %v151 = vadd.f32 %v149, %v150
    %v152 = vrot.slane %v151, 2
    %v153 = vadd.f32 %v151, %v152
    %v154 = vrot.slane %v153, 1
    %v155 = vadd.f32 %v153, %v154
    %s156 = vtos %v155
    %v157 = vmul.f32 %v141, %v141
    %v158 = vmul.f32 %v143, %v143
    %v159 = vsel %vm67, %v157, 0.0
    %v160 = vsel %vm67, %v158, 0.0
    %v161 = vadd.f32 %v159, %v160
    %162 = vadd.xlane.f32.xlu0 %v161
    %v163 = vpop.xlane.xlu0 %162
    %v164 = vrot.slane %v163, 4
    %v165 = vadd.f32 %v163, %v164
    %v166 = vrot.slane %v165, 2
    %v167 = vadd.f32 %v165, %v166
    %v168 = vrot.slane %v167, 1
    %v169 = vadd.f32 %v167, %v168
    %s170 = vtos %v169
    %s171 = smul.f32 %s156, 0.0009765625
    %s172 = smul.f32 %s170, 0.0009765625
    %s173 = smul.f32 %s171, %s171
    %s174 = ssub.f32 %s172, %s173
    %v175 = vstv %s171
    %v176 = vsub.f32 %v141, %v175
    %v177 = vsub.f32 %v143, %v175
    %s178 = sadd.f32 %s174, 1e-05
    %v179 = vstv %s178
    %v180 = vrsqrt.pop %v179
    %s181 = vtos %v180
    %v182 = vstv %s181
    %v183 = vmul.f32 %v176, %v182
    %v184 = vmul.f32 %v177, %v182
    %186 = vset.pattern.permute.xlu0 0
    %187 = vperm.xlu0 %186, %v51
    %v188 = vpop.permute.xlu0 %187
    %v190 = vmul.f32 %v183, %v188
    %v191 = vmul.f32 %v184, %v188
    %193 = vset.pattern.permute.xlu0 0
    %194 = vperm.xlu0 %193, %v52
    %v195 = vpop.permute.xlu0 %194
    %v197 = vadd.f32 %v190, %v195
    %v198 = vadd.f32 %v191, %v195
    %v199 = vmax.f32 %v197, 0.0
    %v200 = vmax.f32 %v198, 0.0
    %s201 = scalar_lea.vmem %s0, 80
    %v202 = vld [vmem:[%s201] sm:$0xff]
    %v203 = vld [vmem:[%s201 + $0x8] sm:$0xff]
    %v204 = vld [vmem:[%s201 + $0x10] sm:$0xff]
    %v205 = vld [vmem:[%s201 + $0x18] sm:$0xff]
    %v206 = vld [vmem:[%s201 + $0x20] sm:$0xff]
    %v207 = vld [vmem:[%s201 + $0x28] sm:$0xff]
    %v208 = vld [vmem:[%s201 + $0x30] sm:$0xff]
    %v209 = vld [vmem:[%s201 + $0x38] sm:$0xff]
    %v210 = vld [vmem:[%s201 + $0x40] sm:$0xf]
    %v211 = vld [vmem:[%s201 + $0x48] sm:$0xf]
    %v213 = vsel %vm67, %v210, 0
    %v216 = vsel %vm67, %v211, 0
    %218 = vmatprep.subr.mxu0 %v203
    %219 = vmatpush1.msra.mxu0 %v202
    %220 = vmatprep.subr.mxu0 %v205
    %221 = vmatpush1.msra.mxu0 %v204
    %222 = vmatprep.subr.mxu0 %v207
    %223 = vmatpush1.msra.mxu0 %v206
    %224 = vmatprep.subr.mxu0 %v209
    %225 = vmatpush1.msra.mxu0 %v208
    %226 = vmatprep.subr.mxu0 %v216
    %227 = vmatpush1.msra.mxu0 %v213
    %228 = vmatprep.subr.mxu0 0.0
    %229 = vmatpush1.msra.mxu0 0.0
    %230 = vmatprep.subr.mxu0 0.0
    %231 = vmatpush1.msra.mxu0 0.0
    %232 = vmatprep.subr.mxu0 0.0
    %233 = vmatpush1.msra.mxu0 0.0
    %234 = vmatprep.subr.mxu0 0.0
    %235 = vmatpush1.msra.mxu0 0.0
    %236 = vmatprep.subr.mxu0 0.0
    %237 = vmatpush1.msra.mxu0 0.0
    %238 = vmatprep.subr.mxu0 0.0
    %239 = vmatpush1.msra.mxu0 0.0
    %240 = vmatprep.subr.mxu0 0.0
    %241 = vmatpush1.msra.mxu0 0.0
    %242 = vmatprep.subr.mxu0 0.0
    %243 = vmatpush1.msra.mxu0 0.0
    %244 = vmatprep.subr.mxu0 0.0
    %245 = vmatpush1.msra.mxu0 0.0
    %246 = vmatprep.subr.mxu0 0.0
    %247 = vmatpush1.msra.mxu0 0.0
    %248 = vmatprep.subr.mxu0 0.0
    %249 = vmatpush1.msra.mxu0 0.0
    %250 = vmatprep.subr.mxu0 0.0
    %251 = vmatpush1.msra.mxu0 0.0
    %252 = vmatprep.subr.mxu0 0.0
    %253 = vmatpush1.msra.mxu0 0.0
    %254 = vmatprep.subr.mxu0 0.0
    %255 = vmatpush1.msra.mxu0 0.0
    %256 = vmatprep.subr.mxu0 0.0
    %257 = vmatpush1.msra.mxu0 0.0
    %258 = vmatprep.subr.mxu0 0.0
    %259 = vmatpush1.msra.mxu0 0.0
    %260 = vmatprep.subr.mxu0 0.0
    %261 = vmatpush1.msra.mxu0 0.0
    %262 = vmatprep.subr.mxu0 0.0
    %263 = vmatpush1.msra.mxu0 0.0
    %264 = vmatprep.subr.mxu0 0.0
    %265 = vmatpush1.msra.mxu0 0.0
    %266 = vmatprep.subr.mxu0 0.0
    %267 = vmatpush1.msra.mxu0 0.0
    %268 = vmatprep.subr.mxu0 0.0
    %269 = vmatpush1.msra.mxu0 0.0
    %270 = vmatprep.subr.mxu0 0.0
    %271 = vmatpush1.msra.mxu0 0.0
    %272 = vmatprep.subr.mxu0 0.0
    %273 = vmatpush1.msra.mxu0 0.0
    %274 = vmatprep.subr.mxu0 0.0
    %275 = vmatpush1.msra.mxu0 0.0
    %276 = vmatprep.subr.mxu0 0.0
    %277 = vmatpush1.msra.mxu0 0.0
    %278 = vmatprep.subr.mxu0 0.0
    %279 = vmatpush1.msra.mxu0 0.0
    %280 = vmatprep.subr.mxu0 0.0
    %281 = vmatpush1.msra.mxu0 0.0
    %282 = vmatprep.mubr.f32.mxu0 0.0
    %283 = vmatmul.mubr.f32.gmra.mrb[0].mxu0 %v65
    %v284 = vpop.f32.mrb[0].mxu0
    %v285 = vadd.f32 0.0, %v284
    %v286 = vpop.f32.mrb[0].mxu0
    %v287 = vadd.f32 0.0, %v286
    %288 = vdwg.mxu0
    %v289 = vsel %vm67, %v285, 0.0
    %v290 = vsel %vm67, %v287, 0.0
    %v291 = vadd.f32 %v289, %v290
    %292 = vadd.xlane.f32.xlu0 %v291
    %v293 = vpop.xlane.xlu0 %292
    %v294 = vrot.slane %v293, 4
    %v295 = vadd.f32 %v293, %v294
    %v296 = vrot.slane %v295, 2
    %v297 = vadd.f32 %v295, %v296
    %v298 = vrot.slane %v297, 1
    %v299 = vadd.f32 %v297, %v298
    %s300 = vtos %v299
    %v301 = vmul.f32 %v285, %v285
    %v302 = vmul.f32 %v287, %v287
    %v303 = vsel %vm67, %v301, 0.0
    %v304 = vsel %vm67, %v302, 0.0
    %v305 = vadd.f32 %v303, %v304
    %306 = vadd.xlane.f32.xlu0 %v305
    %v307 = vpop.xlane.xlu0 %306
    %v308 = vrot.slane %v307, 4
    %v309 = vadd.f32 %v307, %v308
    %v310 = vrot.slane %v309, 2
    %v311 = vadd.f32 %v309, %v310
    %v312 = vrot.slane %v311, 1
    %v313 = vadd.f32 %v311, %v312
    %s314 = vtos %v313
    %s315 = smul.f32 %s300, 0.0009765625
    %s316 = smul.f32 %s314, 0.0009765625
    %s317 = smul.f32 %s315, %s315
    %s318 = ssub.f32 %s316, %s317
    %v319 = vstv %s315
    %v320 = vsub.f32 %v285, %v319
    %v321 = vsub.f32 %v287, %v319
    %s322 = sadd.f32 %s318, 1e-05
    %v323 = vstv %s322
    %v324 = vrsqrt.pop %v323
    %s325 = vtos %v324
    %v326 = vstv %s325
    %v327 = vmul.f32 %v320, %v326
    %v328 = vmul.f32 %v321, %v326
    %v329 = vmul.f32 %v327, %v188
    %v330 = vmul.f32 %v328, %v188
    %v331 = vadd.f32 %v329, %v195
    %v332 = vadd.f32 %v330, %v195
    %v333 = vmax.f32 %v331, 0.0
    %v334 = vmax.f32 %v332, 0.0
    %v337 = vrot.slane %v333, 7
    %v338 = vrot.slane %v334, 7
    %vm341 = vcmask 1040384
    %v342 = vsel %vm341, %v199, %v337
    %v343 = vsel %vm341, %v200, %v338
    %v344 = vld [vmem:[#allocation2] sm:$0xff]
    %v345 = vld [vmem:[#allocation2 + $0x8] sm:$0xff]
    %v346 = vld [vmem:[#allocation2 + $0x10] sm:$0xff]
    %v347 = vld [vmem:[#allocation2 + $0x18] sm:$0xff]
    %v348 = vld [vmem:[#allocation2 + $0x20] sm:$0xff]
    %v349 = vld [vmem:[#allocation2 + $0x28] sm:$0xff]
    %v350 = vld [vmem:[#allocation2 + $0x30] sm:$0xff]
    %v351 = vld [vmem:[#allocation2 + $0x38] sm:$0xff]
    %v352 = vld [vmem:[#allocation2 + $0x40] sm:$0xff]
    %v353 = vld [vmem:[#allocation2 + $0x48] sm:$0xff]
    %v354 = vld [vmem:[#allocation2 + $0x50] sm:$0xff]
    %v355 = vld [vmem:[#allocation2 + $0x58] sm:$0xff]
    %v356 = vld [vmem:[#allocation2 + $0x60] sm:$0xff]
    %v357 = vld [vmem:[#allocation2 + $0x68] sm:$0xff]
    %v358 = vld [vmem:[#allocation2 + $0x70] sm:$0xff]
    %v359 = vld [vmem:[#allocation2 + $0x78] sm:$0xff]
    %v360 = vld [vmem:[#allocation2 + $0x80] sm:$0xff]
    %v361 = vld [vmem:[#allocation2 + $0x88] sm:$0xff]
    %v362 = vld [vmem:[#allocation2 + $0x90] sm:$0xff]
    %v363 = vld [vmem:[#allocation2 + $0x98] sm:$0xff]
    %v364 = vld [vmem:[#allocation2 + $0xa0] sm:$0xff]
    %v365 = vld [vmem:[#allocation2 + $0xa8] sm:$0xff]
    %v366 = vld [vmem:[#allocation2 + $0xb0] sm:$0xff]
    %v367 = vld [vmem:[#allocation2 + $0xb8] sm:$0xff]
    %v368 = vld [vmem:[#allocation2 + $0xc0] sm:$0xff]
    %v369 = vld [vmem:[#allocation2 + $0xc8] sm:$0xff]
    %v370 = vld [vmem:[#allocation2 + $0xd0] sm:$0xff]
    %v371 = vld [vmem:[#allocation2 + $0xd8] sm:$0xff]
    %v372 = vld [vmem:[#allocation2 + $0xe0] sm:$0xff]
    %v373 = vld [vmem:[#allocation2 + $0xe8] sm:$0xff]
    %v374 = vld [vmem:[#allocation2 + $0xf0] sm:$0xff]
    %v375 = vld [vmem:[#allocation2 + $0xf8] sm:$0xff]
    %v376 = vld [vmem:[#allocation2 + $0x100] sm:$0xff]
    %v377 = vld [vmem:[#allocation2 + $0x108] sm:$0xff]
    %v378 = vld [vmem:[#allocation2 + $0x110] sm:$0xff]
    %v379 = vld [vmem:[#allocation2 + $0x118] sm:$0xff]
    %v380 = vld [vmem:[#allocation2 + $0x120] sm:$0xff]
    %v381 = vld [vmem:[#allocation2 + $0x128] sm:$0xff]
    %v382 = vld [vmem:[#allocation2 + $0x130] sm:$0xff]
    %v383 = vld [vmem:[#allocation2 + $0x138] sm:$0xff]
    %v384 = vld [vmem:[#allocation2 + $0x140] sm:$0xff]
    %v385 = vld [vmem:[#allocation2 + $0x148] sm:$0xff]
    %v386 = vld [vmem:[#allocation2 + $0x150] sm:$0xff]
    %v387 = vld [vmem:[#allocation2 + $0x158] sm:$0xff]
    %v388 = vld [vmem:[#allocation2 + $0x160] sm:$0xff]
    %v389 = vld [vmem:[#allocation2 + $0x168] sm:$0xff]
    %v390 = vld [vmem:[#allocation2 + $0x170] sm:$0xff]
    %v391 = vld [vmem:[#allocation2 + $0x178] sm:$0xff]
    %v392 = vld [vmem:[#allocation2 + $0x180] sm:$0xff]
    %v393 = vld [vmem:[#allocation2 + $0x188] sm:$0xff]
    %v394 = vld [vmem:[#allocation2 + $0x190] sm:$0xff]
    %v395 = vld [vmem:[#allocation2 + $0x198] sm:$0xff]
    %v396 = vld [vmem:[#allocation2 + $0x1a0] sm:$0xff]
    %v397 = vld [vmem:[#allocation2 + $0x1a8] sm:$0xff]
    %v398 = vld [vmem:[#allocation2 + $0x1b0] sm:$0xff]
    %v399 = vld [vmem:[#allocation2 + $0x1b8] sm:$0xff]
    %v400 = vld [vmem:[#allocation2 + $0x1c0] sm:$0xff]
    %v401 = vld [vmem:[#allocation2 + $0x1c8] sm:$0xff]
    %v402 = vld [vmem:[#allocation2 + $0x1d0] sm:$0xff]
    %v403 = vld [vmem:[#allocation2 + $0x1d8] sm:$0xff]
    %v404 = vld [vmem:[#allocation2 + $0x1e0] sm:$0xff]
    %v405 = vld [vmem:[#allocation2 + $0x1e8] sm:$0xff]
    %v406 = vld [vmem:[#allocation2 + $0x1f0] sm:$0xff]
    %v407 = vld [vmem:[#allocation2 + $0x1f8] sm:$0xff]
    %v410 = vrot.slane %v199, 1
    %v411 = vrot.slane %v200, 1
    %v414 = vsel %vm341, %v410, %v333
    %v415 = vsel %vm341, %v411, %v334
    %s416 = scalar_lea.vmem [#allocation2], 512
    %v417 = vld [vmem:[%s416] sm:$0xff]
    %v418 = vld [vmem:[%s416 + $0x8] sm:$0xff]
    %v419 = vld [vmem:[%s416 + $0x10] sm:$0xff]
    %v420 = vld [vmem:[%s416 + $0x18] sm:$0xff]
    %v421 = vld [vmem:[%s416 + $0x20] sm:$0xff]
    %v422 = vld [vmem:[%s416 + $0x28] sm:$0xff]
    %v423 = vld [vmem:[%s416 + $0x30] sm:$0xff]
    %v424 = vld [vmem:[%s416 + $0x38] sm:$0xff]
    %v425 = vld [vmem:[%s416 + $0x40] sm:$0xff]
    %v426 = vld [vmem:[%s416 + $0x48] sm:$0xff]
    %v427 = vld [vmem:[%s416 + $0x50] sm:$0xff]
    %v428 = vld [vmem:[%s416 + $0x58] sm:$0xff]
    %v429 = vld [vmem:[%s416 + $0x60] sm:$0xff]
    %v430 = vld [vmem:[%s416 + $0x68] sm:$0xff]
    %v431 = vld [vmem:[%s416 + $0x70] sm:$0xff]
    %v432 = vld [vmem:[%s416 + $0x78] sm:$0xff]
    %v433 = vld [vmem:[%s416 + $0x80] sm:$0xff]
    %v434 = vld [vmem:[%s416 + $0x88] sm:$0xff]
    %v435 = vld [vmem:[%s416 + $0x90] sm:$0xff]
    %v436 = vld [vmem:[%s416 + $0x98] sm:$0xff]
    %v437 = vld [vmem:[%s416 + $0xa0] sm:$0xff]
    %v438 = vld [vmem:[%s416 + $0xa8] sm:$0xff]
    %v439 = vld [vmem:[%s416 + $0xb0] sm:$0xff]
    %v440 = vld [vmem:[%s416 + $0xb8] sm:$0xff]
    %v441 = vld [vmem:[%s416 + $0xc0] sm:$0xff]
    %v442 = vld [vmem:[%s416 + $0xc8] sm:$0xff]
    %v443 = vld [vmem:[%s416 + $0xd0] sm:$0xff]
    %v444 = vld [vmem:[%s416 + $0xd8] sm:$0xff]
    %v445 = vld [vmem:[%s416 + $0xe0] sm:$0xff]
    %v446 = vld [vmem:[%s416 + $0xe8] sm:$0xff]
    %v447 = vld [vmem:[%s416 + $0xf0] sm:$0xff]
    %v448 = vld [vmem:[%s416 + $0xf8] sm:$0xff]
    %v449 = vld [vmem:[%s416 + $0x100] sm:$0xff]
    %v450 = vld [vmem:[%s416 + $0x108] sm:$0xff]
    %v451 = vld [vmem:[%s416 + $0x110] sm:$0xff]
    %v452 = vld [vmem:[%s416 + $0x118] sm:$0xff]
    %v453 = vld [vmem:[%s416 + $0x120] sm:$0xff]
    %v454 = vld [vmem:[%s416 + $0x128] sm:$0xff]
    %v455 = vld [vmem:[%s416 + $0x130] sm:$0xff]
    %v456 = vld [vmem:[%s416 + $0x138] sm:$0xff]
    %v457 = vld [vmem:[%s416 + $0x140] sm:$0xff]
    %v458 = vld [vmem:[%s416 + $0x148] sm:$0xff]
    %v459 = vld [vmem:[%s416 + $0x150] sm:$0xff]
    %v460 = vld [vmem:[%s416 + $0x158] sm:$0xff]
    %v461 = vld [vmem:[%s416 + $0x160] sm:$0xff]
    %v462 = vld [vmem:[%s416 + $0x168] sm:$0xff]
    %v463 = vld [vmem:[%s416 + $0x170] sm:$0xff]
    %v464 = vld [vmem:[%s416 + $0x178] sm:$0xff]
    %v465 = vld [vmem:[%s416 + $0x180] sm:$0xff]
    %v466 = vld [vmem:[%s416 + $0x188] sm:$0xff]
    %v467 = vld [vmem:[%s416 + $0x190] sm:$0xff]
    %v468 = vld [vmem:[%s416 + $0x198] sm:$0xff]
    %v469 = vld [vmem:[%s416 + $0x1a0] sm:$0xff]
    %v470 = vld [vmem:[%s416 + $0x1a8] sm:$0xff]
    %v471 = vld [vmem:[%s416 + $0x1b0] sm:$0xff]
    %v472 = vld [vmem:[%s416 + $0x1b8] sm:$0xff]
    %v473 = vld [vmem:[%s416 + $0x1c0] sm:$0xff]
    %v474 = vld [vmem:[%s416 + $0x1c8] sm:$0xff]
    %v475 = vld [vmem:[%s416 + $0x1d0] sm:$0xff]
    %v476 = vld [vmem:[%s416 + $0x1d8] sm:$0xff]
    %v477 = vld [vmem:[%s416 + $0x1e0] sm:$0xff]
    %v478 = vld [vmem:[%s416 + $0x1e8] sm:$0xff]
    %v479 = vld [vmem:[%s416 + $0x1f0] sm:$0xff]
    %v480 = vld [vmem:[%s416 + $0x1f8] sm:$0xff]
    %481 = vmatprep.subr.mxu0 %v418
    %482 = vmatpush1.msra.mxu0 %v417
    %483 = vmatprep.subr.mxu0 %v420
    %484 = vmatpush1.msra.mxu0 %v419
    %485 = vmatprep.subr.mxu0 %v422
    %486 = vmatpush1.msra.mxu0 %v421
    %487 = vmatprep.subr.mxu0 %v424
    %488 = vmatpush1.msra.mxu0 %v423
    %489 = vmatprep.subr.mxu0 %v426
    %490 = vmatpush1.msra.mxu0 %v425
    %491 = vmatprep.subr.mxu0 %v428
    %492 = vmatpush1.msra.mxu0 %v427
    %493 = vmatprep.subr.mxu0 %v430
    %494 = vmatpush1.msra.mxu0 %v429
    %495 = vmatprep.subr.mxu0 %v432
    %496 = vmatpush1.msra.mxu0 %v431
    %497 = vmatprep.subr.mxu0 %v434
    %498 = vmatpush1.msra.mxu0 %v433
    %499 = vmatprep.subr.mxu0 %v436
    %500 = vmatpush1.msra.mxu0 %v435
    %501 = vmatprep.subr.mxu0 %v438
    %502 = vmatpush1.msra.mxu0 %v437
    %503 = vmatprep.subr.mxu0 %v440
    %504 = vmatpush1.msra.mxu0 %v439
    %505 = vmatprep.subr.mxu0 %v442
    %506 = vmatpush1.msra.mxu0 %v441
    %507 = vmatprep.subr.mxu0 %v444
    %508 = vmatpush1.msra.mxu0 %v443
    %509 = vmatprep.subr.mxu0 %v446
    %510 = vmatpush1.msra.mxu0 %v445
    %511 = vmatprep.subr.mxu0 %v448
    %512 = vmatpush1.msra.mxu0 %v447
    %513 = vmatprep.subr.mxu0 %v450
    %514 = vmatpush1.msra.mxu0 %v449
    %515 = vmatprep.subr.mxu0 %v452
    %516 = vmatpush1.msra.mxu0 %v451
    %517 = vmatprep.subr.mxu0 %v454
    %518 = vmatpush1.msra.mxu0 %v453
    %519 = vmatprep.subr.mxu0 %v456
    %520 = vmatpush1.msra.mxu0 %v455
    %521 = vmatprep.subr.mxu0 %v458
    %522 = vmatpush1.msra.mxu0 %v457
    %523 = vmatprep.subr.mxu0 %v460
    %524 = vmatpush1.msra.mxu0 %v459
    %525 = vmatprep.subr.mxu0 %v462
    %526 = vmatpush1.msra.mxu0 %v461
    %527 = vmatprep.subr.mxu0 %v464
    %528 = vmatpush1.msra.mxu0 %v463
    %529 = vmatprep.subr.mxu0 %v466
    %530 = vmatpush1.msra.mxu0 %v465
    %531 = vmatprep.subr.mxu0 %v468
    %532 = vmatpush1.msra.mxu0 %v467
    %533 = vmatprep.subr.mxu0 %v470
    %534 = vmatpush1.msra.mxu0 %v469
    %535 = vmatprep.subr.mxu0 %v472
    %536 = vmatpush1.msra.mxu0 %v471
    %537 = vmatprep.subr.mxu0 %v474
    %538 = vmatpush1.msra.mxu0 %v473
    %539 = vmatprep.subr.mxu0 %v476
    %540 = vmatpush1.msra.mxu0 %v475
    %541 = vmatprep.subr.mxu0 %v478
    %542 = vmatpush1.msra.mxu0 %v477
    %543 = vmatprep.subr.mxu0 %v480
    %544 = vmatpush1.msra.mxu0 %v479
    %545 = vmatprep.mubr.f32.mxu0 %v415
    %546 = vmatmul.mubr.f32.gmra.mrb[0].mxu0 %v414
    %v547 = vpop.f32.mrb[0].mxu0
    %v548 = vadd.f32 0.0, %v547
    %v549 = vpop.f32.mrb[0].mxu0
    %v550 = vadd.f32 0.0, %v549
    %551 = vdwg.mxu0
    %552 = vmatprep.subr.mxu0 %v345
    %553 = vmatpush1.msra.mxu0 %v344
    %554 = vmatprep.subr.mxu0 %v347
    %555 = vmatpush1.msra.mxu0 %v346
    %556 = vmatprep.subr.mxu0 %v349
    %557 = vmatpush1.msra.mxu0 %v348
    %558 = vmatprep.subr.mxu0 %v351
    %559 = vmatpush1.msra.mxu0 %v350
    %560 = vmatprep.subr.mxu0 %v353
    %561 = vmatpush1.msra.mxu0 %v352
    %562 = vmatprep.subr.mxu0 %v355
    %563 = vmatpush1.msra.mxu0 %v354
    %564 = vmatprep.subr.mxu0 %v357
    %565 = vmatpush1.msra.mxu0 %v356
    %566 = vmatprep.subr.mxu0 %v359
    %567 = vmatpush1.msra.mxu0 %v358
    %568 = vmatprep.subr.mxu0 %v361
    %569 = vmatpush1.msra.mxu0 %v360
    %570 = vmatprep.subr.mxu0 %v363
    %571 = vmatpush1.msra.mxu0 %v362
    %572 = vmatprep.subr.mxu0 %v365
    %573 = vmatpush1.msra.mxu0 %v364
    %574 = vmatprep.subr.mxu0 %v367
    %575 = vmatpush1.msra.mxu0 %v366
    %576 = vmatprep.subr.mxu0 %v369
    %577 = vmatpush1.msra.mxu0 %v368
    %578 = vmatprep.subr.mxu0 %v371
    %579 = vmatpush1.msra.mxu0 %v370
    %580 = vmatprep.subr.mxu0 %v373
    %581 = vmatpush1.msra.mxu0 %v372
    %582 = vmatprep.subr.mxu0 %v375
    %583 = vmatpush1.msra.mxu0 %v374
    %584 = vmatprep.subr.mxu0 %v377
    %585 = vmatpush1.msra.mxu0 %v376
    %586 = vmatprep.subr.mxu0 %v379
    %587 = vmatpush1.msra.mxu0 %v378
    %588 = vmatprep.subr.mxu0 %v381
    %589 = vmatpush1.msra.mxu0 %v380
    %590 = vmatprep.subr.mxu0 %v383
    %591 = vmatpush1.msra.mxu0 %v382
    %592 = vmatprep.subr.mxu0 %v385
    %593 = vmatpush1.msra.mxu0 %v384
    %594 = vmatprep.subr.mxu0 %v387
    %595 = vmatpush1.msra.mxu0 %v386
    %596 = vmatprep.subr.mxu0 %v389
    %597 = vmatpush1.msra.mxu0 %v388
    %598 = vmatprep.subr.mxu0 %v391
    %599 = vmatpush1.msra.mxu0 %v390
    %600 = vmatprep.subr.mxu0 %v393
    %601 = vmatpush1.msra.mxu0 %v392
    %602 = vmatprep.subr.mxu0 %v395
    %603 = vmatpush1.msra.mxu0 %v394
    %604 = vmatprep.subr.mxu0 %v397
    %605 = vmatpush1.msra.mxu0 %v396
    %606 = vmatprep.subr.mxu0 %v399
    %607 = vmatpush1.msra.mxu0 %v398
    %608 = vmatprep.subr.mxu0 %v401
    %609 = vmatpush1.msra.mxu0 %v400
    %610 = vmatprep.subr.mxu0 %v403
    %611 = vmatpush1.msra.mxu0 %v402
    %612 = vmatprep.subr.mxu0 %v405
    %613 = vmatpush1.msra.mxu0 %v404
    %614 = vmatprep.subr.mxu0 %v407
    %615 = vmatpush1.msra.mxu0 %v406
    %616 = vmatprep.mubr.f32.mxu0 %v343
    %617 = vmatmul.mubr.f32.gmra.mrb[0].mxu0 %v342
    %v618 = vpop.f32.mrb[0].mxu0
    %v619 = vadd.f32 %v548, %v618
    %v620 = vpop.f32.mrb[0].mxu0
    %v621 = vadd.f32 %v550, %v620
    %622 = vdwg.mxu0
    %v623 = vrot.slane %v199, 2
    %v624 = vrot.slane %v200, 2
    %v627 = vrot.slane %v333, 1
    %v628 = vrot.slane %v334, 1
    %v631 = vsel %vm341, %v623, %v627
    %v632 = vsel %vm341, %v624, %v628
    %s633 = scalar_lea.vmem [#allocation2], 1024
    %v634 = vld [vmem:[%s633] sm:$0xff]
    %v635 = vld [vmem:[%s633 + $0x8] sm:$0xff]
    %v636 = vld [vmem:[%s633 + $0x10] sm:$0xff]
    %v637 = vld [vmem:[%s633 + $0x18] sm:$0xff]
    %v638 = vld [vmem:[%s633 + $0x20] sm:$0xff]
    %v639 = vld [vmem:[%s633 + $0x28] sm:$0xff]
    %v640 = vld [vmem:[%s633 + $0x30] sm:$0xff]
    %v641 = vld [vmem:[%s633 + $0x38] sm:$0xff]
    %v642 = vld [vmem:[%s633 + $0x40] sm:$0xff]
    %v643 = vld [vmem:[%s633 + $0x48] sm:$0xff]
    %v644 = vld [vmem:[%s633 + $0x50] sm:$0xff]
    %v645 = vld [vmem:[%s633 + $0x58] sm:$0xff]
    %v646 = vld [vmem:[%s633 + $0x60] sm:$0xff]
    %v647 = vld [vmem:[%s633 + $0x68] sm:$0xff]
    %v648 = vld [vmem:[%s633 + $0x70] sm:$0xff]
    %v649 = vld [vmem:[%s633 + $0x78] sm:$0xff]
    %v650 = vld [vmem:[%s633 + $0x80] sm:$0xff]
    %v651 = vld [vmem:[%s633 + $0x88] sm:$0xff]
    %v652 = vld [vmem:[%s633 + $0x90] sm:$0xff]
    %v653 = vld [vmem:[%s633 + $0x98] sm:$0xff]
    %v654 = vld [vmem:[%s633 + $0xa0] sm:$0xff]
    %v655 = vld [vmem:[%s633 + $0xa8] sm:$0xff]
    %v656 = vld [vmem:[%s633 + $0xb0] sm:$0xff]
    %v657 = vld [vmem:[%s633 + $0xb8] sm:$0xff]
    %v658 = vld [vmem:[%s633 + $0xc0] sm:$0xff]
    %v659 = vld [vmem:[%s633 + $0xc8] sm:$0xff]
    %v660 = vld [vmem:[%s633 + $0xd0] sm:$0xff]
    %v661 = vld [vmem:[%s633 + $0xd8] sm:$0xff]
    %v662 = vld [vmem:[%s633 + $0xe0] sm:$0xff]
    %v663 = vld [vmem:[%s633 + $0xe8] sm:$0xff]
    %v664 = vld [vmem:[%s633 + $0xf0] sm:$0xff]
    %v665 = vld [vmem:[%s633 + $0xf8] sm:$0xff]
    %v666 = vld [vmem:[%s633 + $0x100] sm:$0xff]
    %v667 = vld [vmem:[%s633 + $0x108] sm:$0xff]
    %v668 = vld [vmem:[%s633 + $0x110] sm:$0xff]
    %v669 = vld [vmem:[%s633 + $0x118] sm:$0xff]
    %v670 = vld [vmem:[%s633 + $0x120] sm:$0xff]
    %v671 = vld [vmem:[%s633 + $0x128] sm:$0xff]
    %v672 = vld [vmem:[%s633 + $0x130] sm:$0xff]
    %v673 = vld [vmem:[%s633 + $0x138] sm:$0xff]
    %v674 = vld [vmem:[%s633 + $0x140] sm:$0xff]
    %v675 = vld [vmem:[%s633 + $0x148] sm:$0xff]
    %v676 = vld [vmem:[%s633 + $0x150] sm:$0xff]
    %v677 = vld [vmem:[%s633 + $0x158] sm:$0xff]
    %v678 = vld [vmem:[%s633 + $0x160] sm:$0xff]
    %v679 = vld [vmem:[%s633 + $0x168] sm:$0xff]
    %v680 = vld [vmem:[%s633 + $0x170] sm:$0xff]
    %v681 = vld [vmem:[%s633 + $0x178] sm:$0xff]
    %v682 = vld [vmem:[%s633 + $0x180] sm:$0xff]
    %v683 = vld [vmem:[%s633 + $0x188] sm:$0xff]
    %v684 = vld [vmem:[%s633 + $0x190] sm:$0xff]
    %v685 = vld [vmem:[%s633 + $0x198] sm:$0xff]
    %v686 = vld [vmem:[%s633 + $0x1a0] sm:$0xff]
    %v687 = vld [vmem:[%s633 + $0x1a8] sm:$0xff]
    %v688 = vld [vmem:[%s633 + $0x1b0] sm:$0xff]
    %v689 = vld [vmem:[%s633 + $0x1b8] sm:$0xff]
    %v690 = vld [vmem:[%s633 + $0x1c0] sm:$0xff]
    %v691 = vld [vmem:[%s633 + $0x1c8] sm:$0xff]
    %v692 = vld [vmem:[%s633 + $0x1d0] sm:$0xff]
    %v693 = vld [vmem:[%s633 + $0x1d8] sm:$0xff]
    %v694 = vld [vmem:[%s633 + $0x1e0] sm:$0xff]
    %v695 = vld [vmem:[%s633 + $0x1e8] sm:$0xff]
    %v696 = vld [vmem:[%s633 + $0x1f0] sm:$0xff]
    %v697 = vld [vmem:[%s633 + $0x1f8] sm:$0xff]
    %698 = vmatprep.subr.mxu0 %v635
    %699 = vmatpush1.msra.mxu0 %v634
    %700 = vmatprep.subr.mxu0 %v637
    %701 = vmatpush1.msra.mxu0 %v636
    %702 = vmatprep.subr.mxu0 %v639
    %703 = vmatpush1.msra.mxu0 %v638
    %704 = vmatprep.subr.mxu0 %v641
    %705 = vmatpush1.msra.mxu0 %v640
    %706 = vmatprep.subr.mxu0 %v643
    %707 = vmatpush1.msra.mxu0 %v642
    %708 = vmatprep.subr.mxu0 %v645
    %709 = vmatpush1.msra.mxu0 %v644
    %710 = vmatprep.subr.mxu0 %v647
    %711 = vmatpush1.msra.mxu0 %v646
    %712 = vmatprep.subr.mxu0 %v649
    %713 = vmatpush1.msra.mxu0 %v648
    %714 = vmatprep.subr.mxu0 %v651
    %715 = vmatpush1.msra.mxu0 %v650
    %716 = vmatprep.subr.mxu0 %v653
    %717 = vmatpush1.msra.mxu0 %v652
    %718 = vmatprep.subr.mxu0 %v655
    %719 = vmatpush1.msra.mxu0 %v654
    %720 = vmatprep.subr.mxu0 %v657
    %721 = vmatpush1.msra.mxu0 %v656
    %722 = vmatprep.subr.mxu0 %v659
    %723 = vmatpush1.msra.mxu0 %v658
    %724 = vmatprep.subr.mxu0 %v661
    %725 = vmatpush1.msra.mxu0 %v660
    %726 = vmatprep.subr.mxu0 %v663
    %727 = vmatpush1.msra.mxu0 %v662
    %728 = vmatprep.subr.mxu0 %v665
    %729 = vmatpush1.msra.mxu0 %v664
    %730 = vmatprep.subr.mxu0 %v667
    %731 = vmatpush1.msra.mxu0 %v666
    %732 = vmatprep.subr.mxu0 %v669
    %733 = vmatpush1.msra.mxu0 %v668
    %734 = vmatprep.subr.mxu0 %v671
    %735 = vmatpush1.msra.mxu0 %v670
    %736 = vmatprep.subr.mxu0 %v673
    %737 = vmatpush1.msra.mxu0 %v672
    %738 = vmatprep.subr.mxu0 %v675
    %739 = vmatpush1.msra.mxu0 %v674
    %740 = vmatprep.subr.mxu0 %v677
    %741 = vmatpush1.msra.mxu0 %v676
    %742 = vmatprep.subr.mxu0 %v679
    %743 = vmatpush1.msra.mxu0 %v678
    %744 = vmatprep.subr.mxu0 %v681
    %745 = vmatpush1.msra.mxu0 %v680
    %746 = vmatprep.subr.mxu0 %v683
    %747 = vmatpush1.msra.mxu0 %v682
    %748 = vmatprep.subr.mxu0 %v685
    %749 = vmatpush1.msra.mxu0 %v684
    %750 = vmatprep.subr.mxu0 %v687
    %751 = vmatpush1.msra.mxu0 %v686
    %752 = vmatprep.subr.mxu0 %v689
    %753 = vmatpush1.msra.mxu0 %v688
    %754 = vmatprep.subr.mxu0 %v691
    %755 = vmatpush1.msra.mxu0 %v690
    %756 = vmatprep.subr.mxu0 %v693
    %757 = vmatpush1.msra.mxu0 %v692
    %758 = vmatprep.subr.mxu0 %v695
    %759 = vmatpush1.msra.mxu0 %v694
    %760 = vmatprep.subr.mxu0 %v697
    %761 = vmatpush1.msra.mxu0 %v696
    %762 = vmatprep.mubr.f32.mxu0 %v632
    %763 = vmatmul.mubr.f32.gmra.mrb[0].mxu0 %v631
    %v764 = vpop.f32.mrb[0].mxu0
    %v765 = vadd.f32 0.0, %v764
    %v766 = vpop.f32.mrb[0].mxu0
    %v767 = vadd.f32 0.0, %v766
    %768 = vdwg.mxu0
    %v769 = vadd.f32 %v619, %v765
    %v770 = vadd.f32 %v621, %v767
    %v771 = vrot.slane %v199, 3
    %v772 = vrot.slane %v200, 3
    %v775 = vrot.slane %v333, 2
    %v776 = vrot.slane %v334, 2
    %v779 = vsel %vm341, %v771, %v775
    %v780 = vsel %vm341, %v772, %v776
    %s781 = scalar_lea.vmem [#allocation2], 1536
    %v782 = vld [vmem:[%s781] sm:$0xff]
    %v783 = vld [vmem:[%s781 + $0x8] sm:$0xff]
    %v784 = vld [vmem:[%s781 + $0x10] sm:$0xff]
    %v785 = vld [vmem:[%s781 + $0x18] sm:$0xff]
    %v786 = vld [vmem:[%s781 + $0x20] sm:$0xff]
    %v787 = vld [vmem:[%s781 + $0x28] sm:$0xff]
    %v788 = vld [vmem:[%s781 + $0x30] sm:$0xff]
    %v789 = vld [vmem:[%s781 + $0x38] sm:$0xff]
    %v790 = vld [vmem:[%s781 + $0x40] sm:$0xff]
    %v791 = vld [vmem:[%s781 + $0x48] sm:$0xff]
    %v792 = vld [vmem:[%s781 + $0x50] sm:$0xff]
    %v793 = vld [vmem:[%s781 + $0x58] sm:$0xff]
    %v794 = vld [vmem:[%s781 + $0x60] sm:$0xff]
    %v795 = vld [vmem:[%s781 + $0x68] sm:$0xff]
    %v796 = vld [vmem:[%s781 + $0x70] sm:$0xff]
    %v797 = vld [vmem:[%s781 + $0x78] sm:$0xff]
    %v798 = vld [vmem:[%s781 + $0x80] sm:$0xff]
    %v799 = vld [vmem:[%s781 + $0x88] sm:$0xff]
    %v800 = vld [vmem:[%s781 + $0x90] sm:$0xff]
    %v801 = vld [vmem:[%s781 + $0x98] sm:$0xff]
    %v802 = vld [vmem:[%s781 + $0xa0] sm:$0xff]
    %v803 = vld [vmem:[%s781 + $0xa8] sm:$0xff]
    %v804 = vld [vmem:[%s781 + $0xb0] sm:$0xff]
    %v805 = vld [vmem:[%s781 + $0xb8] sm:$0xff]
    %v806 = vld [vmem:[%s781 + $0xc0] sm:$0xff]
    %v807 = vld [vmem:[%s781 + $0xc8] sm:$0xff]
    %v808 = vld [vmem:[%s781 + $0xd0] sm:$0xff]
    %v809 = vld [vmem:[%s781 + $0xd8] sm:$0xff]
    %v810 = vld [vmem:[%s781 + $0xe0] sm:$0xff]
    %v811 = vld [vmem:[%s781 + $0xe8] sm:$0xff]
    %v812 = vld [vmem:[%s781 + $0xf0] sm:$0xff]
    %v813 = vld [vmem:[%s781 + $0xf8] sm:$0xff]
    %v814 = vld [vmem:[%s781 + $0x100] sm:$0xff]
    %v815 = vld [vmem:[%s781 + $0x108] sm:$0xff]
    %v816 = vld [vmem:[%s781 + $0x110] sm:$0xff]
    %v817 = vld [vmem:[%s781 + $0x118] sm:$0xff]
    %v818 = vld [vmem:[%s781 + $0x120] sm:$0xff]
    %v819 = vld [vmem:[%s781 + $0x128] sm:$0xff]
    %v820 = vld [vmem:[%s781 + $0x130] sm:$0xff]
    %v821 = vld [vmem:[%s781 + $0x138] sm:$0xff]
    %v822 = vld [vmem:[%s781 + $0x140] sm:$0xff]
    %v823 = vld [vmem:[%s781 + $0x148] sm:$0xff]
    %v824 = vld [vmem:[%s781 + $0x150] sm:$0xff]
    %v825 = vld [vmem:[%s781 + $0x158] sm:$0xff]
    %v826 = vld [vmem:[%s781 + $0x160] sm:$0xff]
    %v827 = vld [vmem:[%s781 + $0x168] sm:$0xff]
    %v828 = vld [vmem:[%s781 + $0x170] sm:$0xff]
    %v829 = vld [vmem:[%s781 + $0x178] sm:$0xff]
    %v830 = vld [vmem:[%s781 + $0x180] sm:$0xff]
    %v831 = vld [vmem:[%s781 + $0x188] sm:$0xff]
    %v832 = vld [vmem:[%s781 + $0x190] sm:$0xff]
    %v833 = vld [vmem:[%s781 + $0x198] sm:$0xff]
    %v834 = vld [vmem:[%s781 + $0x1a0] sm:$0xff]
    %v835 = vld [vmem:[%s781 + $0x1a8] sm:$0xff]
    %v836 = vld [vmem:[%s781 + $0x1b0] sm:$0xff]
    %v837 = vld [vmem:[%s781 + $0x1b8] sm:$0xff]
    %v838 = vld [vmem:[%s781 + $0x1c0] sm:$0xff]
    %v839 = vld [vmem:[%s781 + $0x1c8] sm:$0xff]
    %v840 = vld [vmem:[%s781 + $0x1d0] sm:$0xff]
    %v841 = vld [vmem:[%s781 + $0x1d8] sm:$0xff]
    %v842 = vld [vmem:[%s781 + $0x1e0] sm:$0xff]
    %v843 = vld [vmem:[%s781 + $0x1e8] sm:$0xff]
    %v844 = vld [vmem:[%s781 + $0x1f0] sm:$0xff]
    %v845 = vld [vmem:[%s781 + $0x1f8] sm:$0xff]
    %846 = vmatprep.subr.mxu0 %v783
    %847 = vmatpush1.msra.mxu0 %v782
    %848 = vmatprep.subr.mxu0 %v785
    %849 = vmatpush1.msra.mxu0 %v784
    %850 = vmatprep.subr.mxu0 %v787
    %851 = vmatpush1.msra.mxu0 %v786
    %852 = vmatprep.subr.mxu0 %v789
    %853 = vmatpush1.msra.mxu0 %v788
    %854 = vmatprep.subr.mxu0 %v791
    %855 = vmatpush1.msra.mxu0 %v790
    %856 = vmatprep.subr.mxu0 %v793
    %857 = vmatpush1.msra.mxu0 %v792
    %858 = vmatprep.subr.mxu0 %v795
    %859 = vmatpush1.msra.mxu0 %v794
    %860 = vmatprep.subr.mxu0 %v797
    %861 = vmatpush1.msra.mxu0 %v796
    %862 = vmatprep.subr.mxu0 %v799
    %863 = vmatpush1.msra.mxu0 %v798
    %864 = vmatprep.subr.mxu0 %v801
    %865 = vmatpush1.msra.mxu0 %v800
    %866 = vmatprep.subr.mxu0 %v803
    %867 = vmatpush1.msra.mxu0 %v802
    %868 = vmatprep.subr.mxu0 %v805
    %869 = vmatpush1.msra.mxu0 %v804
    %870 = vmatprep.subr.mxu0 %v807
    %871 = vmatpush1.msra.mxu0 %v806
    %872 = vmatprep.subr.mxu0 %v809
    %873 = vmatpush1.msra.mxu0 %v808
    %874 = vmatprep.subr.mxu0 %v811
    %875 = vmatpush1.msra.mxu0 %v810
    %876 = vmatprep.subr.mxu0 %v813
    %877 = vmatpush1.msra.mxu0 %v812
    %878 = vmatprep.subr.mxu0 %v815
    %879 = vmatpush1.msra.mxu0 %v814
    %880 = vmatprep.subr.mxu0 %v817
    %881 = vmatpush1.msra.mxu0 %v816
    %882 = vmatprep.subr.mxu0 %v819
    %883 = vmatpush1.msra.mxu0 %v818
    %884 = vmatprep.subr.mxu0 %v821
    %885 = vmatpush1.msra.mxu0 %v820
    %886 = vmatprep.subr.mxu0 %v823
    %887 = vmatpush1.msra.mxu0 %v822
    %888 = vmatprep.subr.mxu0 %v825
    %889 = vmatpush1.msra.mxu0 %v824
    %890 = vmatprep.subr.mxu0 %v827
    %891 = vmatpush1.msra.mxu0 %v826
    %892 = vmatprep.subr.mxu0 %v829
    %893 = vmatpush1.msra.mxu0 %v828
    %894 = vmatprep.subr.mxu0 %v831
    %895 = vmatpush1.msra.mxu0 %v830
    %896 = vmatprep.subr.mxu0 %v833
    %897 = vmatpush1.msra.mxu0 %v832
    %898 = vmatprep.subr.mxu0 %v835
    %899 = vmatpush1.msra.mxu0 %v834
    %900 = vmatprep.subr.mxu0 %v837
    %901 = vmatpush1.msra.mxu0 %v836
    %902 = vmatprep.subr.mxu0 %v839
    %903 = vmatpush1.msra.mxu0 %v838
    %904 = vmatprep.subr.mxu0 %v841
    %905 = vmatpush1.msra.mxu0 %v840
    %906 = vmatprep.subr.mxu0 %v843
    %907 = vmatpush1.msra.mxu0 %v842
    %908 = vmatprep.subr.mxu0 %v845
    %909 = vmatpush1.msra.mxu0 %v844
    %910 = vmatprep.mubr.f32.mxu0 %v780
    %911 = vmatmul.mubr.f32.gmra.mrb[0].mxu0 %v779
    %v912 = vpop.f32.mrb[0].mxu0
    %v913 = vadd.f32 0.0, %v912
    %v914 = vpop.f32.mrb[0].mxu0
    %v915 = vadd.f32 0.0, %v914
    %916 = vdwg.mxu0
    %v917 = vadd.f32 %v769, %v913
    %v918 = vadd.f32 %v770, %v915
    %v919 = vld [vmem:[%s5] sm:$0x3]
    %v921 = vlaneseq
    %v922 = vshrl.u32 %v921, 7
    %v923 = vsub.s32 0, %v922
    %v924 = vrot.slane %v919, %v923
    %v925 = vlaneseq
    %v926 = vshrl.u32 %v925, 7
    %v927 = vsub.s32 1, %v926
    %v928 = vrot.slane %v919, %v927
    %v931 = vadd.f32 %v917, %v924
    %v932 = vadd.f32 %v918, %v928
    %v933 = vmax.f32 %v931, 0.0
    %v934 = vmax.f32 %v932, 0.0
    %v935 = vld [vmem:[%s6] sm:$0xff]
    %v936 = vld [vmem:[%s6 + $0x8] sm:$0xff]
    %v937 = vld [vmem:[%s6 + $0x10] sm:$0xff]
    %v938 = vld [vmem:[%s6 + $0x18] sm:$0xff]
    %v939 = vld [vmem:[%s6 + $0x20] sm:$0xff]
    %v940 = vld [vmem:[%s6 + $0x28] sm:$0xff]
    %v941 = vld [vmem:[%s6 + $0x30] sm:$0xff]
    %v942 = vld [vmem:[%s6 + $0x38] sm:$0xff]
    %v943 = vld [vmem:[%s6 + $0x40] sm:$0xff]
    %v944 = vld [vmem:[%s6 + $0x48] sm:$0xff]
    %v945 = vld [vmem:[%s6 + $0x50] sm:$0xff]
    %v946 = vld [vmem:[%s6 + $0x58] sm:$0xff]
    %v947 = vld [vmem:[%s6 + $0x60] sm:$0xff]
    %v948 = vld [vmem:[%s6 + $0x68] sm:$0xff]
    %v949 = vld [vmem:[%s6 + $0x70] sm:$0xff]
    %v950 = vld [vmem:[%s6 + $0x78] sm:$0xff]
    %v951 = vld [vmem:[%s6 + $0x80] sm:$0xff]
    %v952 = vld [vmem:[%s6 + $0x88] sm:$0xff]
    %v953 = vld [vmem:[%s6 + $0x90] sm:$0xff]
    %v954 = vld [vmem:[%s6 + $0x98] sm:$0xff]
    %v955 = vld [vmem:[%s6 + $0xa0] sm:$0xff]
    %v956 = vld [vmem:[%s6 + $0xa8] sm:$0xff]
    %v957 = vld [vmem:[%s6 + $0xb0] sm:$0xff]
    %v958 = vld [vmem:[%s6 + $0xb8] sm:$0xff]
    %v959 = vld [vmem:[%s6 + $0xc0] sm:$0xff]
    %v960 = vld [vmem:[%s6 + $0xc8] sm:$0xff]
    %v961 = vld [vmem:[%s6 + $0xd0] sm:$0xff]
    %v962 = vld [vmem:[%s6 + $0xd8] sm:$0xff]
    %v963 = vld [vmem:[%s6 + $0xe0] sm:$0xff]
    %v964 = vld [vmem:[%s6 + $0xe8] sm:$0xff]
    %v965 = vld [vmem:[%s6 + $0xf0] sm:$0xff]
    %v966 = vld [vmem:[%s6 + $0xf8] sm:$0xff]
    %v967 = vld [vmem:[%s6 + $0x100] sm:$0xff]
    %v968 = vld [vmem:[%s6 + $0x108] sm:$0xff]
    %v969 = vld [vmem:[%s6 + $0x110] sm:$0xff]
    %v970 = vld [vmem:[%s6 + $0x118] sm:$0xff]
    %v971 = vld [vmem:[%s6 + $0x120] sm:$0xff]
    %v972 = vld [vmem:[%s6 + $0x128] sm:$0xff]
    %v973 = vld [vmem:[%s6 + $0x130] sm:$0xff]
    %v974 = vld [vmem:[%s6 + $0x138] sm:$0xff]
    %v975 = vld [vmem:[%s6 + $0x140] sm:$0xff]
    %v976 = vld [vmem:[%s6 + $0x148] sm:$0xff]
    %v977 = vld [vmem:[%s6 + $0x150] sm:$0xff]
    %v978 = vld [vmem:[%s6 + $0x158] sm:$0xff]
    %v979 = vld [vmem:[%s6 + $0x160] sm:$0xff]
    %v980 = vld [vmem:[%s6 + $0x168] sm:$0xff]
    %v981 = vld [vmem:[%s6 + $0x170] sm:$0xff]
    %v982 = vld [vmem:[%s6 + $0x178] sm:$0xff]
    %v983 = vld [vmem:[%s6 + $0x180] sm:$0xff]
    %v984 = vld [vmem:[%s6 + $0x188] sm:$0xff]
    %v985 = vld [vmem:[%s6 + $0x190] sm:$0xff]
    %v986 = vld [vmem:[%s6 + $0x198] sm:$0xff]
    %v987 = vld [vmem:[%s6 + $0x1a0] sm:$0xff]
    %v988 = vld [vmem:[%s6 + $0x1a8] sm:$0xff]
    %v989 = vld [vmem:[%s6 + $0x1b0] sm:$0xff]
    %v990 = vld [vmem:[%s6 + $0x1b8] sm:$0xff]
    %v991 = vld [vmem:[%s6 + $0x1c0] sm:$0xff]
    %v992 = vld [vmem:[%s6 + $0x1c8] sm:$0xff]
    %v993 = vld [vmem:[%s6 + $0x1d0] sm:$0xff]
    %v994 = vld [vmem:[%s6 + $0x1d8] sm:$0xff]
    %v995 = vld [vmem:[%s6 + $0x1e0] sm:$0xff]
    %v996 = vld [vmem:[%s6 + $0x1e8] sm:$0xff]
    %v997 = vld [vmem:[%s6 + $0x1f0] sm:$0xff]
    %v998 = vld [vmem:[%s6 + $0x1f8] sm:$0xff]
    %v999 = vld [vmem:[%s7] sm:$0x3]
    %v1001 = vlaneseq
    %v1002 = vshrl.u32 %v1001, 7
    %v1003 = vsub.s32 0, %v1002
    %v1004 = vrot.slane %v999, %v1003
    %v1005 = vlaneseq
    %v1006 = vshrl.u32 %v1005, 7
    %v1007 = vsub.s32 1, %v1006
    %v1008 = vrot.slane %v999, %v1007
    %1011 = vmatprep.subr.mxu0 %v936
    %1012 = vmatpush1.msra.mxu0 %v935
    %1013 = vmatprep.subr.mxu0 %v938
    %1014 = vmatpush1.msra.mxu0 %v937
    %1015 = vmatprep.subr.mxu0 %v940
    %1016 = vmatpush1.msra.mxu0 %v939
    %1017 = vmatprep.subr.mxu0 %v942
    %1018 = vmatpush1.msra.mxu0 %v941
    %1019 = vmatprep.subr.mxu0 %v944
    %1020 = vmatpush1.msra.mxu0 %v943
    %1021 = vmatprep.subr.mxu0 %v946
    %1022 = vmatpush1.msra.mxu0 %v945
    %1023 = vmatprep.subr.mxu0 %v948
    %1024 = vmatpush1.msra.mxu0 %v947
    %1025 = vmatprep.subr.mxu0 %v950
    %1026 = vmatpush1.msra.mxu0 %v949
    %1027 = vmatprep.subr.mxu0 %v952
    %1028 = vmatpush1.msra.mxu0 %v951
    %1029 = vmatprep.subr.mxu0 %v954
    %1030 = vmatpush1.msra.mxu0 %v953
    %1031 = vmatprep.subr.mxu0 %v956
    %1032 = vmatpush1.msra.mxu0 %v955
    %1033 = vmatprep.subr.mxu0 %v958
    %1034 = vmatpush1.msra.mxu0 %v957
    %1035 = vmatprep.subr.mxu0 %v960
    %1036 = vmatpush1.msra.mxu0 %v959
    %1037 = vmatprep.subr.mxu0 %v962
    %1038 = vmatpush1.msra.mxu0 %v961
    %1039 = vmatprep.subr.mxu0 %v964
    %1040 = vmatpush1.msra.mxu0 %v963
    %1041 = vmatprep.subr.mxu0 %v966
    %1042 = vmatpush1.msra.mxu0 %v965
    %1043 = vmatprep.subr.mxu0 %v968
    %1044 = vmatpush1.msra.mxu0 %v967
    %1045 = vmatprep.subr.mxu0 %v970
    %1046 = vmatpush1.msra.mxu0 %v969
    %1047 = vmatprep.subr.mxu0 %v972
    %1048 = vmatpush1.msra.mxu0 %v971
    %1049 = vmatprep.subr.mxu0 %v974
    %1050 = vmatpush1.msra.mxu0 %v973
    %1051 = vmatprep.subr.mxu0 %v976
    %1052 = vmatpush1.msra.mxu0 %v975
    %1053 = vmatprep.subr.mxu0 %v978
    %1054 = vmatpush1.msra.mxu0 %v977
    %1055 = vmatprep.subr.mxu0 %v980
    %1056 = vmatpush1.msra.mxu0 %v979
    %1057 = vmatprep.subr.mxu0 %v982
    %1058 = vmatpush1.msra.mxu0 %v981
    %1059 = vmatprep.subr.mxu0 %v984
    %1060 = vmatpush1.msra.mxu0 %v983
    %1061 = vmatprep.subr.mxu0 %v986
    %1062 = vmatpush1.msra.mxu0 %v985
    %1063 = vmatprep.subr.mxu0 %v988
    %1064 = vmatpush1.msra.mxu0 %v987
    %1065 = vmatprep.subr.mxu0 %v990
    %1066 = vmatpush1.msra.mxu0 %v989
    %1067 = vmatprep.subr.mxu0 %v992
    %1068 = vmatpush1.msra.mxu0 %v991
    %1069 = vmatprep.subr.mxu0 %v994
    %1070 = vmatpush1.msra.mxu0 %v993
    %1071 = vmatprep.subr.mxu0 %v996
    %1072 = vmatpush1.msra.mxu0 %v995
    %1073 = vmatprep.subr.mxu0 %v998
    %1074 = vmatpush1.msra.mxu0 %v997
    %1075 = vmatprep.mubr.f32.mxu0 %v934
    %1076 = vmatmul.mubr.f32.gmra.mrb[0].mxu0 %v933
    %v1077 = vpop.f32.mrb[0].mxu0
    %v1078 = vadd.f32 %v1004, %v1077
    %v1079 = vpop.f32.mrb[0].mxu0
    %v1080 = vadd.f32 %v1008, %v1079
    %1081 = vdwg.mxu0
    %v1082 = vmax.f32 %v1078, 0.0
    %v1083 = vmax.f32 %v1080, 0.0
    %v1084 = vld [vmem:[%s8] sm:$0xff]
    %v1085 = vld [vmem:[%s8 + $0x8] sm:$0xff]
    %v1086 = vld [vmem:[%s8 + $0x10] sm:$0xff]
    %v1087 = vld [vmem:[%s8 + $0x18] sm:$0xff]
    %v1088 = vld [vmem:[%s8 + $0x20] sm:$0xff]
    %v1089 = vld [vmem:[%s8 + $0x28] sm:$0xff]
    %v1090 = vld [vmem:[%s8 + $0x30] sm:$0xff]
    %v1091 = vld [vmem:[%s8 + $0x38] sm:$0xff]
    %v1092 = vld [vmem:[%s8 + $0x40] sm:$0xff]
    %v1093 = vld [vmem:[%s8 + $0x48] sm:$0xff]
    %v1094 = vld [vmem:[%s8 + $0x50] sm:$0xff]
    %v1095 = vld [vmem:[%s8 + $0x58] sm:$0xff]
    %v1096 = vld [vmem:[%s8 + $0x60] sm:$0xff]
    %v1097 = vld [vmem:[%s8 + $0x68] sm:$0xff]
    %v1098 = vld [vmem:[%s8 + $0x70] sm:$0xff]
    %v1099 = vld [vmem:[%s8 + $0x78] sm:$0xff]
    %v1100 = vld [vmem:[%s8 + $0x80] sm:$0xff]
    %v1101 = vld [vmem:[%s8 + $0x88] sm:$0xff]
    %v1102 = vld [vmem:[%s8 + $0x90] sm:$0xff]
    %v1103 = vld [vmem:[%s8 + $0x98] sm:$0xff]
    %v1104 = vld [vmem:[%s8 + $0xa0] sm:$0xff]
    %v1105 = vld [vmem:[%s8 + $0xa8] sm:$0xff]
    %v1106 = vld [vmem:[%s8 + $0xb0] sm:$0xff]
    %v1107 = vld [vmem:[%s8 + $0xb8] sm:$0xff]
    %v1108 = vld [vmem:[%s8 + $0xc0] sm:$0xff]
    %v1109 = vld [vmem:[%s8 + $0xc8] sm:$0xff]
    %v1110 = vld [vmem:[%s8 + $0xd0] sm:$0xff]
    %v1111 = vld [vmem:[%s8 + $0xd8] sm:$0xff]
    %v1112 = vld [vmem:[%s8 + $0xe0] sm:$0xff]
    %v1113 = vld [vmem:[%s8 + $0xe8] sm:$0xff]
    %v1114 = vld [vmem:[%s8 + $0xf0] sm:$0xff]
    %v1115 = vld [vmem:[%s8 + $0xf8] sm:$0xff]
    %v1116 = vld [vmem:[%s9] sm:$0x1]
    %v1118 = vlaneseq
    %v1119 = vshrl.u32 %v1118, 7
    %v1120 = vsub.s32 0, %v1119
    %v1121 = vrot.slane %v1116, %v1120
    %1123 = vmatprep.subr.mxu0 0.0
    %1124 = vmatpush1.msra.mxu0 %v1084
    %1125 = vmatprep.subr.mxu0 0.0
    %1126 = vmatpush1.msra.mxu0 %v1085
    %1127 = vmatprep.subr.mxu0 0.0
    %1128 = vmatpush1.msra.mxu0 %v1086
    %1129 = vmatprep.subr.mxu0 0.0
    %1130 = vmatpush1.msra.mxu0 %v1087
    %1131 = vmatprep.subr.mxu0 0.0
    %1132 = vmatpush1.msra.mxu0 %v1088
    %1133 = vmatprep.subr.mxu0 0.0
    %1134 = vmatpush1.msra.mxu0 %v1089
    %1135 = vmatprep.subr.mxu0 0.0
    %1136 = vmatpush1.msra.mxu0 %v1090
    %1137 = vmatprep.subr.mxu0 0.0
    %1138 = vmatpush1.msra.mxu0 %v1091
    %1139 = vmatprep.subr.mxu0 0.0
    %1140 = vmatpush1.msra.mxu0 %v1092
    %1141 = vmatprep.subr.mxu0 0.0
    %1142 = vmatpush1.msra.mxu0 %v1093
    %1143 = vmatprep.subr.mxu0 0.0
    %1144 = vmatpush1.msra.mxu0 %v1094
    %1145 = vmatprep.subr.mxu0 0.0
    %1146 = vmatpush1.msra.mxu0 %v1095
    %1147 = vmatprep.subr.mxu0 0.0
    %1148 = vmatpush1.msra.mxu0 %v1096
    %1149 = vmatprep.subr.mxu0 0.0
    %1150 = vmatpush1.msra.mxu0 %v1097
    %1151 = vmatprep.subr.mxu0 0.0
    %1152 = vmatpush1.msra.mxu0 %v1098
    %1153 = vmatprep.subr.mxu0 0.0
    %1154 = vmatpush1.msra.mxu0 %v1099
    %1155 = vmatprep.subr.mxu0 0.0
    %1156 = vmatpush1.msra.mxu0 %v1100
    %1157 = vmatprep.subr.mxu0 0.0
    %1158 = vmatpush1.msra.mxu0 %v1101
    %1159 = vmatprep.subr.mxu0 0.0
    %1160 = vmatpush1.msra.mxu0 %v1102
    %1161 = vmatprep.subr.mxu0 0.0
    %1162 = vmatpush1.msra.mxu0 %v1103
    %1163 = vmatprep.subr.mxu0 0.0
    %1164 = vmatpush1.msra.mxu0 %v1104
    %1165 = vmatprep.subr.mxu0 0.0
    %1166 = vmatpush1.msra.mxu0 %v1105
    %1167 = vmatprep.subr.mxu0 0.0
    %1168 = vmatpush1.msra.mxu0 %v1106
    %1169 = vmatprep.subr.mxu0 0.0
    %1170 = vmatpush1.msra.mxu0 %v1107
    %1171 = vmatprep.subr.mxu0 0.0
    %1172 = vmatpush1.msra.mxu0 %v1108
    %1173 = vmatprep.subr.mxu0 0.0
    %1174 = vmatpush1.msra.mxu0 %v1109
    %1175 = vmatprep.subr.mxu0 0.0
    %1176 = vmatpush1.msra.mxu0 %v1110
    %1177 = vmatprep.subr.mxu0 0.0
    %1178 = vmatpush1.msra.mxu0 %v1111
    %1179 = vmatprep.subr.mxu0 0.0
    %1180 = vmatpush1.msra.mxu0 %v1112
    %1181 = vmatprep.subr.mxu0 0.0
    %1182 = vmatpush1.msra.mxu0 %v1113
    %1183 = vmatprep.subr.mxu0 0.0
    %1184 = vmatpush1.msra.mxu0 %v1114
    %1185 = vmatprep.subr.mxu0 0.0
    %1186 = vmatpush1.msra.mxu0 %v1115
    %1187 = vmatprep.mubr.f32.mxu0 %v1083
    %1188 = vmatmul.mubr.f32.gmra.mrb[0].mxu0 %v1082
    %v1189 = vpop.f32.mrb[0].mxu0
    %v1190 = vadd.f32 %v1121, %v1189
    %v1191 = vpop.f32.mrb[0].mxu0
    %1192 = vdwg.mxu0
    %v1193 = vsub.f32 0.0, %v1190
    %v1194 = vmul.f32 %v1193, 1.442695
    %v1195 = vpow.pop %v1194
    %v1196 = vadd.f32 %v1195, 1.0
    %v1197 = vrcp.pop %v1196
    %v1198 = vmul.f32 1.0, %v1197
    %v1199 = vlaneseq
    %v1200 = vand.u32 %v1199, 127
    %vm1201 = vcmp.ge.s32.totalorder %v1200, 4
    %v1202 = vsel %vm1201, %v1198, %v1190
    %vm1203 = vcmask 58368
    %1204 = vst.msk [vmem:[#allocation5] sm:$0x3] %vm1203, %v1202
    // Predicated region
    $region46: #{tpu_custom_call.1} parent=1 // pred_check
      _
    $region47: #{tpu_custom_call.1} parent=1 // pred_check_branch
      %1206 = sbr.rel (0) target = $region49
    $region48: #{tpu_custom_call.1} parent=1 // pred_region
      %s1208 = ssub.s32 32, 32
      %1209 = vsyncadd [#allocation4], %s1208
      %s1211 = sshll.u32 [#allocation5], 4
      %s1212 = int_to_ptr.vmem [resolvable:$true] %s1211
      %1214 = dma.vmem_to_hbm [thread:$0]  %s1212, 32, %s10, [#allocation4]
    $region49: #{tpu_custom_call.1} parent=1 // pred_fallthru
      _
    // Predicated region
    $region50: #{tpu_custom_call.1} parent=1 // pred_check
      _
    $region51: #{tpu_custom_call.1} parent=1 // pred_check_branch
      %1216 = sbr.rel (0) target = $region53
    $region52: #{tpu_custom_call.1} parent=1 // pred_region
      %1217 = dma.done [#allocation4], 32
    $region53: #{tpu_custom_call.1} parent=1 // pred_fallthru
      _
    %1218 = vsyncpa [#allocation3], 1
    %1219 = vsyncpa [#allocation4], 1

</llo_original>
